<compile_context>
chip_gen: v5e
topology: v5e:2x2
jax: 0.10.0
libtpu: 0.0.40
codegen_flags: <defaults>
</compile_context>

<pallas_src>
import jax
import jax.numpy as jnp
from jax.experimental import pallas as pl
from jax.experimental.pallas import tpu as pltpu

KERNEL_SIZE = 7                      # must be 3 or 7, as in the PyTorch module
PAD = 3 if KERNEL_SIZE == 7 else 1
_LANES = 128
_SUBLANES = 8


def _round_up(v, m):
    return ((v + m - 1) // m) * m


def _vmem_capacity_bytes():
    try:
        info = pltpu.get_tpu_info()
        cap = getattr(info, "vmem_capacity_bytes", None)
        if cap:
            return int(cap)
    except Exception:
        pass
    return 64 * 1024 * 1024          # conservative: v7x per-TensorCore VMEM


def _rows_per_chunk(H, W, BB):
    """Feature-map rows per inner conv iteration.

    Chunks are whole rows, so chunk-internal circular column shifts only wrap
    at row boundaries (which the column masks zero anyway).  Sized so the ~10
    live (BB, chunk) f32 planes stay (mostly) register-resident.
    """
    if BB * H * W <= 4096:           # <= 4 vregs per plane: single chunk
        return H
    limit = max(1, 4096 // max(1, BB * W))
    best = 1
    for th in range(1, H + 1):
        if H % th == 0 and th <= limit:
            best = th
    return best


def _make_kernel(BB, C_total, H, W, Lpad, n_c_steps, rows_per_chunk):
    """Kernel for a fixed (batch-block, channel-steps, H, W)."""
    KS, P = KERNEL_SIZE, PAD
    HW = H * W
    TQ = rows_per_chunk * W
    n_chunks = H // rows_per_chunk

    def write_planes(avg, mx, pad_ref):
        # Zero only the halos; the interior is fully overwritten every time.
        halo = jnp.zeros((BB, Lpad), jnp.float32)
        for c in range(2):
            pad_ref[c, :, :Lpad] = halo
            pad_ref[c, :, Lpad + HW:] = halo
        pad_ref[0, :, Lpad:Lpad + HW] = avg
        pad_ref[1, :, Lpad:Lpad + HW] = mx

    def conv_sigmoid_store(w_ref, o_ref, pad_ref):
        # Column index within a row.  Chunk starts are multiples of W, so this
        # is chunk-invariant and hoisted out of the chunk loop.
        col = jax.lax.broadcasted_iota(jnp.int32, (BB, TQ), 1)
        if W & (W - 1) == 0:
            col = jnp.bitwise_and(col, W - 1)
        else:
            col = col % W

        def chunk(q0):
            # 14 row-shifted planes -> 7 per-column-offset accumulators
            # (pure VALU FMAs) -> 7 masked circular column shifts.
            ts = [jnp.zeros((BB, TQ), jnp.float32) for _ in range(KS)]
            for c in range(2):
                for i in range(KS):
                    start = Lpad + (i - P) * W          # static, >= 0
                    rs = pad_ref[c, :, pl.ds(start + q0, TQ)]
                    for j in range(KS):
                        wt = w_ref[c * KS * KS + i * KS + j]   # SMEM scalar
                        ts[j] = ts[j] + wt * rs
            acc = ts[P]                                  # j == P: no shift/mask
            for j in range(KS):
                if j == P:
                    continue
                cs = j - P
                # Lanes that wrap around the chunk are exactly column-wrap
                # lanes, which the mask zeroes -> circular roll is exact.
                shifted = pltpu.roll(ts[j], shift=(-cs) % TQ, axis=1)
                keep = (col + cs >= 0) & (col + cs < W)
                acc = acc + jnp.where(keep, shifted, 0.0)
            o_ref[:, pl.ds(q0, TQ)] = jax.nn.sigmoid(acc).astype(o_ref.dtype)

        if n_chunks == 1:
            chunk(0)
        else:
            @pl.loop(0, n_chunks)
            def _(t):
                chunk(t * TQ)

    if n_c_steps == 1:
        def kernel(x_ref, w_ref, o_ref, pad_ref):
            x = x_ref[...].astype(jnp.float32)           # (BB, C, HW)
            write_planes(jnp.mean(x, axis=1), jnp.max(x, axis=1), pad_ref)
            conv_sigmoid_store(w_ref, o_ref, pad_ref)
        return kernel

    inv_c = 1.0 / float(C_total)

    def kernel(x_ref, w_ref, o_ref, sum_ref, max_ref, pad_ref):
        k = pl.program_id(1)
        x = x_ref[...].astype(jnp.float32)               # (BB, CB, HW)
        psum = jnp.sum(x, axis=1)
        pmax = jnp.max(x, axis=1)

        @pl.when(k == 0)
        def _():
            sum_ref[...] = psum
            max_ref[...] = pmax

        @pl.when(k > 0)
        def _():
            sum_ref[...] = sum_ref[...] + psum
            max_ref[...] = jnp.maximum(max_ref[...], pmax)

        @pl.when(k == n_c_steps - 1)
        def _():
            write_planes(sum_ref[...] * inv_c, max_ref[...], pad_ref)
            conv_sigmoid_store(w_ref, o_ref, pad_ref)

    return kernel


def spatial_attention(x, w, *, block_batch=None, block_channels=None):
    """x: (N, C, H, W), w: (1, 2, K, K) -> (N, 1, H, W)."""
    N, C, H, W = x.shape
    KS = KERNEL_SIZE
    assert KS in (3, 7)
    assert w.shape == (1, 2, KS, KS)
    HW = H * W
    Lpad = _round_up(PAD * W + PAD, _LANES)   # lane-aligned flat halo length
    itemsize = x.dtype.itemsize

    vmem_cap = _vmem_capacity_bytes()
    budget = min(int(vmem_cap * 0.6), 48 * 1024 * 1024)

    hw_p = _round_up(HW, _LANES)
    pad_p = _round_up(HW + 2 * Lpad, _LANES)

    def usage(bb, cb, in_bufs=2):
        bb_p = _round_up(bb, _SUBLANES)
        cb_p = _round_up(cb, _SUBLANES)
        u = in_bufs * bb * cb_p * hw_p * itemsize        # pipelined input blocks
        u += 2 * bb_p * hw_p * itemsize                  # pipelined output blocks
        u += 2 * bb_p * pad_p * 4                        # padded feature planes
        u += 2 * bb_p * hw_p * 4                         # running sum / max
        return u

    target_in = 4 * 1024 * 1024                          # ~4 MiB input blocks

    def pick_bb(cb):
        if N <= _SUBLANES:
            return N
        bb = min(N, max(_SUBLANES, target_in // max(1, cb * hw_p * itemsize)))
        bb = max(_SUBLANES, (bb // _SUBLANES) * _SUBLANES)
        while bb > _SUBLANES and usage(bb, cb) > budget:
            bb = max(_SUBLANES, ((bb // 2) // _SUBLANES) * _SUBLANES)
        return bb

    if block_channels is not None:
        cb_opts = [block_channels]
    else:
        # Full C first, then 8-divisible divisors of C (largest first).
        cb_opts = [C] + sorted(
            (d for d in range(_SUBLANES, C, _SUBLANES) if C % d == 0),
            reverse=True)

    bb = cb = None
    for cand in cb_opts:
        b = block_batch if block_batch is not None else pick_bb(cand)
        if usage(b, cand) <= budget or cand == cb_opts[-1]:
            bb, cb = b, cand
            break
    # Last resort for huge C*HW with no 8-divisible channel tile: shrink the
    # batch block below 8 (sublane-sparse but correct).
    if block_batch is None:
        while bb > 1 and usage(bb, cb) > budget:
            bb -= 1
    # TODO(synk): add channel masking so the channel tile need not divide C.

    # Keep a few pipelined grid steps (helps v7x's 2 TensorCores and hides the
    # prologue/epilogue DMAs) but never shrink blocks below ~2 MiB for it.
    if block_batch is None:
        while (pl.cdiv(N, bb) < 4 and bb > _SUBLANES
               and (bb // 2) * cb * hw_p * itemsize >= 2 * 1024 * 1024):
            bb = max(_SUBLANES, ((bb // 2) // _SUBLANES) * _SUBLANES)

    nb = pl.cdiv(N, bb)
    nk = C // cb
    assert cb == C or (C % cb == 0 and cb % _SUBLANES == 0)

    rows = _rows_per_chunk(H, W, bb)

    # Third input buffer: small win for pure streaming once steps are plentiful
    # and VMEM headroom exists (inactive for tiny problems).
    x_spec_kwargs = {}
    if nb * nk >= 4 and usage(bb, cb, in_bufs=3) <= budget:
        x_spec_kwargs["pipeline_mode"] = pl.Buffered(3)

    x_flat = x.reshape(N, C, HW)                 # lane-dense: H*W on lanes
    w_flat = w.reshape(-1).astype(jnp.float32)   # (2*KS*KS,) SMEM scalars

    scratch = []
    if nk > 1:
        scratch += [pltpu.VMEM((bb, HW), jnp.float32),   # running sum
                    pltpu.VMEM((bb, HW), jnp.float32)]   # running max
    scratch += [pltpu.VMEM((2, bb, HW + 2 * Lpad), jnp.float32)]

    vmem_limit = int(min(max(vmem_cap - 8 * 1024 * 1024, 32 * 1024 * 1024),
                         max(usage(bb, cb, in_bufs=3) + 4 * 1024 * 1024,
                             32 * 1024 * 1024)))

    out_flat = pl.pallas_call(
        _make_kernel(bb, C, H, W, Lpad, nk, rows),
        out_shape=jax.ShapeDtypeStruct((N, HW), x.dtype),
        grid_spec=pltpu.PrefetchScalarGridSpec(
            num_scalar_prefetch=0,
            grid=(nb, nk),
            in_specs=[
                pl.BlockSpec((bb, cb, HW), lambda b, k: (b, k, 0),
                             **x_spec_kwargs),
                pl.BlockSpec(memory_space=pltpu.MemorySpace.SMEM),
            ],
            out_specs=pl.BlockSpec((bb, HW), lambda b, k: (b, 0)),
            scratch_shapes=scratch,
        ),
        compiler_params=pltpu.CompilerParams(
            dimension_semantics=("parallel", "arbitrary"),
            vmem_limit_bytes=vmem_limit),
    )(x_flat, w_flat)

    return out_flat.reshape(N, 1, H, W)


def spatial_attention_reference(x, w):
    """Plain-JAX reference matching the PyTorch forward exactly."""
    avg_out = jnp.mean(x, axis=1, keepdims=True)
    max_out = jnp.max(x, axis=1, keepdims=True)
    feats = jnp.concatenate([avg_out, max_out], axis=1)      # (N, 2, H, W)
    y = jax.lax.conv_general_dilated(
        feats, w, window_strides=(1, 1),
        padding=((PAD, PAD), (PAD, PAD)),
        dimension_numbers=("NCHW", "OIHW", "NCHW"))
    return jax.nn.sigmoid(y)


if __name__ == "__main__":
    key = jax.random.PRNGKey(0)
    kx, kw = jax.random.split(key)

    N, C, H, W = 2, 4, 16, 16
    x = jax.random.normal(kx, (N, C, H, W), dtype=jnp.float32)

    # Deterministic synthetic conv weight: Conv2d(2, 1, 7, bias=False) -> (1, 2, 7, 7)
    fan_in = 2 * KERNEL_SIZE * KERNEL_SIZE
    w = jax.random.normal(kw, (1, 2, KERNEL_SIZE, KERNEL_SIZE),
                          dtype=jnp.float32) * (fan_in ** -0.5)

    out = jax.block_until_ready(spatial_attention(x, w))

    ref = spatial_attention_reference(x, w)
    assert out.shape == (N, 1, H, W)
    assert jnp.allclose(out, ref, atol=1e-5, rtol=1e-5), "mismatch vs reference"

    print("KERNEL_OK")
</pallas_src>

<mosaic_0001>
module attributes {stable_mosaic.version = 11 : i64} {
  func.func @kernel(%arg0: i32, %arg1: i32, %arg2: memref<2x4x256xf32, #tpu.memory_space<vmem>>, %arg3: memref<98xf32, #tpu.memory_space<smem>>, %arg4: memref<2x256xf32, #tpu.memory_space<vmem>>, %arg5: memref<2x2x512xf32, #tpu.memory_space<vmem>>) attributes {dimension_semantics = [#tpu.dimension_semantics<parallel>, #tpu.dimension_semantics<arbitrary>], iteration_bounds = array<i64: 1, 1>, scalar_prefetch = 0 : i64, scratch_operands = 1 : i64, tpu.core_type = #tpu.core_type<tc>, window_params = [{transform_indices = @transform_0, window_bounds = array<i64: 2, 4, 256>}, {transform_indices = @transform_1, window_bounds = array<i64: 98>}, {transform_indices = @transform_2, window_bounds = array<i64: 2, 256>}]} {
    %c0 = arith.constant 0 : index
    %c0_0 = arith.constant 0 : index
    %c0_1 = arith.constant 0 : index
    %0 = vector.load %arg2[%c0, %c0_0, %c0_1] : memref<2x4x256xf32, #tpu.memory_space<vmem>>, vector<2x4x256xf32>
    %cst = arith.constant dense<0.000000e+00> : vector<2x256xf32>
    %1 = vector.multi_reduction <add>, %0, %cst [1] : vector<2x4x256xf32> to vector<2x256xf32>
    %cst_2 = arith.constant 4.000000e+00 : f32
    %2 = vector.broadcast %cst_2 : f32 to vector<2x256xf32>
    %3 = arith.divf %1, %2 : vector<2x256xf32>
    %cst_3 = arith.constant dense<0xFF800000> : vector<2x256xf32>
    %4 = vector.multi_reduction <maximumf>, %0, %cst_3 [1] : vector<2x4x256xf32> to vector<2x256xf32>
    %cst_4 = arith.constant 0.000000e+00 : f32
    %5 = vector.broadcast %cst_4 : f32 to vector<2x128xf32>
    %c0_5 = arith.constant 0 : index
    %c0_6 = arith.constant 0 : index
    %c0_7 = arith.constant 0 : index
    %6 = vector.load %arg5[%c0_5, %c0_6, %c0_7] : memref<2x2x512xf32, #tpu.memory_space<vmem>>, vector<1x2x128xf32>
    %7 = vector.shape_cast %6 : vector<1x2x128xf32> to vector<2x128xf32>
    %8 = vector.shape_cast %5 : vector<2x128xf32> to vector<1x2x128xf32>
    tpu.vector_store %arg5[%c0_5, %c0_6, %c0_7], %8 {strides = array<i32>} : memref<2x2x512xf32, #tpu.memory_space<vmem>>, vector<1x2x128xf32>,
    %c0_8 = arith.constant 0 : index
    %c0_9 = arith.constant 0 : index
    %c384 = arith.constant 384 : index
    %9 = vector.load %arg5[%c0_8, %c0_9, %c384] : memref<2x2x512xf32, #tpu.memory_space<vmem>>, vector<1x2x128xf32>
    %10 = vector.shape_cast %9 : vector<1x2x128xf32> to vector<2x128xf32>
    %11 = vector.shape_cast %5 : vector<2x128xf32> to vector<1x2x128xf32>
    tpu.vector_store %arg5[%c0_8, %c0_9, %c384], %11 {strides = array<i32>} : memref<2x2x512xf32, #tpu.memory_space<vmem>>, vector<1x2x128xf32>,
    %c1 = arith.constant 1 : index
    %c0_10 = arith.constant 0 : index
    %c0_11 = arith.constant 0 : index
    %12 = vector.load %arg5[%c1, %c0_10, %c0_11] : memref<2x2x512xf32, #tpu.memory_space<vmem>>, vector<1x2x128xf32>
    %13 = vector.shape_cast %12 : vector<1x2x128xf32> to vector<2x128xf32>
    %14 = vector.shape_cast %5 : vector<2x128xf32> to vector<1x2x128xf32>
    tpu.vector_store %arg5[%c1, %c0_10, %c0_11], %14 {strides = array<i32>} : memref<2x2x512xf32, #tpu.memory_space<vmem>>, vector<1x2x128xf32>,
    %c1_12 = arith.constant 1 : index
    %c0_13 = arith.constant 0 : index
    %c384_14 = arith.constant 384 : index
    %15 = vector.load %arg5[%c1_12, %c0_13, %c384_14] : memref<2x2x512xf32, #tpu.memory_space<vmem>>, vector<1x2x128xf32>
    %16 = vector.shape_cast %15 : vector<1x2x128xf32> to vector<2x128xf32>
    %17 = vector.shape_cast %5 : vector<2x128xf32> to vector<1x2x128xf32>
    tpu.vector_store %arg5[%c1_12, %c0_13, %c384_14], %17 {strides = array<i32>} : memref<2x2x512xf32, #tpu.memory_space<vmem>>, vector<1x2x128xf32>,
    %c0_15 = arith.constant 0 : index
    %c0_16 = arith.constant 0 : index
    %c128 = arith.constant 128 : index
    %18 = vector.load %arg5[%c0_15, %c0_16, %c128] : memref<2x2x512xf32, #tpu.memory_space<vmem>>, vector<1x2x256xf32>
    %19 = vector.shape_cast %18 : vector<1x2x256xf32> to vector<2x256xf32>
    %20 = vector.shape_cast %3 : vector<2x256xf32> to vector<1x2x256xf32>
    tpu.vector_store %arg5[%c0_15, %c0_16, %c128], %20 {strides = array<i32>} : memref<2x2x512xf32, #tpu.memory_space<vmem>>, vector<1x2x256xf32>,
    %c1_17 = arith.constant 1 : index
    %c0_18 = arith.constant 0 : index
    %c128_19 = arith.constant 128 : index
    %21 = vector.load %arg5[%c1_17, %c0_18, %c128_19] : memref<2x2x512xf32, #tpu.memory_space<vmem>>, vector<1x2x256xf32>
    %22 = vector.shape_cast %21 : vector<1x2x256xf32> to vector<2x256xf32>
    %23 = vector.shape_cast %4 : vector<2x256xf32> to vector<1x2x256xf32>
    tpu.vector_store %arg5[%c1_17, %c0_18, %c128_19], %23 {strides = array<i32>} : memref<2x2x512xf32, #tpu.memory_space<vmem>>, vector<1x2x256xf32>,
    %24 = tpu.iota {dimensions = array<i32: 1>} : vector<2x256xi32>
    %c15_i32 = arith.constant 15 : i32
    %25 = vector.broadcast %c15_i32 : i32 to vector<2x256xi32>
    %26 = arith.andi %24, %25 : vector<2x256xi32>
    %cst_20 = arith.constant 0.000000e+00 : f32
    %27 = vector.broadcast %cst_20 : f32 to vector<2x256xf32>
    %cst_21 = arith.constant 0.000000e+00 : f32
    %28 = vector.broadcast %cst_21 : f32 to vector<2x256xf32>
    %cst_22 = arith.constant 0.000000e+00 : f32
    %29 = vector.broadcast %cst_22 : f32 to vector<2x256xf32>
    %cst_23 = arith.constant 0.000000e+00 : f32
    %30 = vector.broadcast %cst_23 : f32 to vector<2x256xf32>
    %cst_24 = arith.constant 0.000000e+00 : f32
    %31 = vector.broadcast %cst_24 : f32 to vector<2x256xf32>
    %cst_25 = arith.constant 0.000000e+00 : f32
    %32 = vector.broadcast %cst_25 : f32 to vector<2x256xf32>
    %cst_26 = arith.constant 0.000000e+00 : f32
    %33 = vector.broadcast %cst_26 : f32 to vector<2x256xf32>
    %c0_27 = arith.constant 0 : index
    %c0_28 = arith.constant 0 : index
    %c80 = arith.constant 80 : index
    %34 = vector.load %arg5[%c0_27, %c0_28, %c80] : memref<2x2x512xf32, #tpu.memory_space<vmem>>, vector<1x2x256xf32>
    %35 = vector.shape_cast %34 : vector<1x2x256xf32> to vector<2x256xf32>
    %c0_29 = arith.constant 0 : index
    %36 = memref.load %arg3[%c0_29] : memref<98xf32, #tpu.memory_space<smem>>
    %37 = vector.broadcast %36 : f32 to vector<2x256xf32>
    %38 = arith.mulf %37, %35 : vector<2x256xf32>
    %39 = arith.addf %27, %38 : vector<2x256xf32>
    %c1_30 = arith.constant 1 : index
    %40 = memref.load %arg3[%c1_30] : memref<98xf32, #tpu.memory_space<smem>>
    %41 = vector.broadcast %40 : f32 to vector<2x256xf32>
    %42 = arith.mulf %41, %35 : vector<2x256xf32>
    %43 = arith.addf %28, %42 : vector<2x256xf32>
    %c2 = arith.constant 2 : index
    %44 = memref.load %arg3[%c2] : memref<98xf32, #tpu.memory_space<smem>>
    %45 = vector.broadcast %44 : f32 to vector<2x256xf32>
    %46 = arith.mulf %45, %35 : vector<2x256xf32>
    %47 = arith.addf %29, %46 : vector<2x256xf32>
    %c3 = arith.constant 3 : index
    %48 = memref.load %arg3[%c3] : memref<98xf32, #tpu.memory_space<smem>>
    %49 = vector.broadcast %48 : f32 to vector<2x256xf32>
    %50 = arith.mulf %49, %35 : vector<2x256xf32>
    %51 = arith.addf %30, %50 : vector<2x256xf32>
    %c4 = arith.constant 4 : index
    %52 = memref.load %arg3[%c4] : memref<98xf32, #tpu.memory_space<smem>>
    %53 = vector.broadcast %52 : f32 to vector<2x256xf32>
    %54 = arith.mulf %53, %35 : vector<2x256xf32>
    %55 = arith.addf %31, %54 : vector<2x256xf32>
    %c5 = arith.constant 5 : index
    %56 = memref.load %arg3[%c5] : memref<98xf32, #tpu.memory_space<smem>>
    %57 = vector.broadcast %56 : f32 to vector<2x256xf32>
    %58 = arith.mulf %57, %35 : vector<2x256xf32>
    %59 = arith.addf %32, %58 : vector<2x256xf32>
    %c6 = arith.constant 6 : index
    %60 = memref.load %arg3[%c6] : memref<98xf32, #tpu.memory_space<smem>>
    %61 = vector.broadcast %60 : f32 to vector<2x256xf32>
    %62 = arith.mulf %61, %35 : vector<2x256xf32>
    %63 = arith.addf %33, %62 : vector<2x256xf32>
    %c0_31 = arith.constant 0 : index
    %c0_32 = arith.constant 0 : index
    %c96 = arith.constant 96 : index
    %64 = vector.load %arg5[%c0_31, %c0_32, %c96] : memref<2x2x512xf32, #tpu.memory_space<vmem>>, vector<1x2x256xf32>
    %65 = vector.shape_cast %64 : vector<1x2x256xf32> to vector<2x256xf32>
    %c7 = arith.constant 7 : index
    %66 = memref.load %arg3[%c7] : memref<98xf32, #tpu.memory_space<smem>>
    %67 = vector.broadcast %66 : f32 to vector<2x256xf32>
    %68 = arith.mulf %67, %65 : vector<2x256xf32>
    %69 = arith.addf %39, %68 : vector<2x256xf32>
    %c8 = arith.constant 8 : index
    %70 = memref.load %arg3[%c8] : memref<98xf32, #tpu.memory_space<smem>>
    %71 = vector.broadcast %70 : f32 to vector<2x256xf32>
    %72 = arith.mulf %71, %65 : vector<2x256xf32>
    %73 = arith.addf %43, %72 : vector<2x256xf32>
    %c9 = arith.constant 9 : index
    %74 = memref.load %arg3[%c9] : memref<98xf32, #tpu.memory_space<smem>>
    %75 = vector.broadcast %74 : f32 to vector<2x256xf32>
    %76 = arith.mulf %75, %65 : vector<2x256xf32>
    %77 = arith.addf %47, %76 : vector<2x256xf32>
    %c10 = arith.constant 10 : index
    %78 = memref.load %arg3[%c10] : memref<98xf32, #tpu.memory_space<smem>>
    %79 = vector.broadcast %78 : f32 to vector<2x256xf32>
    %80 = arith.mulf %79, %65 : vector<2x256xf32>
    %81 = arith.addf %51, %80 : vector<2x256xf32>
    %c11 = arith.constant 11 : index
    %82 = memref.load %arg3[%c11] : memref<98xf32, #tpu.memory_space<smem>>
    %83 = vector.broadcast %82 : f32 to vector<2x256xf32>
    %84 = arith.mulf %83, %65 : vector<2x256xf32>
    %85 = arith.addf %55, %84 : vector<2x256xf32>
    %c12 = arith.constant 12 : index
    %86 = memref.load %arg3[%c12] : memref<98xf32, #tpu.memory_space<smem>>
    %87 = vector.broadcast %86 : f32 to vector<2x256xf32>
    %88 = arith.mulf %87, %65 : vector<2x256xf32>
    %89 = arith.addf %59, %88 : vector<2x256xf32>
    %c13 = arith.constant 13 : index
    %90 = memref.load %arg3[%c13] : memref<98xf32, #tpu.memory_space<smem>>
    %91 = vector.broadcast %90 : f32 to vector<2x256xf32>
    %92 = arith.mulf %91, %65 : vector<2x256xf32>
    %93 = arith.addf %63, %92 : vector<2x256xf32>
    %c0_33 = arith.constant 0 : index
    %c0_34 = arith.constant 0 : index
    %c112 = arith.constant 112 : index
    %94 = vector.load %arg5[%c0_33, %c0_34, %c112] : memref<2x2x512xf32, #tpu.memory_space<vmem>>, vector<1x2x256xf32>
    %95 = vector.shape_cast %94 : vector<1x2x256xf32> to vector<2x256xf32>
    %c14 = arith.constant 14 : index
    %96 = memref.load %arg3[%c14] : memref<98xf32, #tpu.memory_space<smem>>
    %97 = vector.broadcast %96 : f32 to vector<2x256xf32>
    %98 = arith.mulf %97, %95 : vector<2x256xf32>
    %99 = arith.addf %69, %98 : vector<2x256xf32>
    %c15 = arith.constant 15 : index
    %100 = memref.load %arg3[%c15] : memref<98xf32, #tpu.memory_space<smem>>
    %101 = vector.broadcast %100 : f32 to vector<2x256xf32>
    %102 = arith.mulf %101, %95 : vector<2x256xf32>
    %103 = arith.addf %73, %102 : vector<2x256xf32>
    %c16 = arith.constant 16 : index
    %104 = memref.load %arg3[%c16] : memref<98xf32, #tpu.memory_space<smem>>
    %105 = vector.broadcast %104 : f32 to vector<2x256xf32>
    %106 = arith.mulf %105, %95 : vector<2x256xf32>
    %107 = arith.addf %77, %106 : vector<2x256xf32>
    %c17 = arith.constant 17 : index
    %108 = memref.load %arg3[%c17] : memref<98xf32, #tpu.memory_space<smem>>
    %109 = vector.broadcast %108 : f32 to vector<2x256xf32>
    %110 = arith.mulf %109, %95 : vector<2x256xf32>
    %111 = arith.addf %81, %110 : vector<2x256xf32>
    %c18 = arith.constant 18 : index
    %112 = memref.load %arg3[%c18] : memref<98xf32, #tpu.memory_space<smem>>
    %113 = vector.broadcast %112 : f32 to vector<2x256xf32>
    %114 = arith.mulf %113, %95 : vector<2x256xf32>
    %115 = arith.addf %85, %114 : vector<2x256xf32>
    %c19 = arith.constant 19 : index
    %116 = memref.load %arg3[%c19] : memref<98xf32, #tpu.memory_space<smem>>
    %117 = vector.broadcast %116 : f32 to vector<2x256xf32>
    %118 = arith.mulf %117, %95 : vector<2x256xf32>
    %119 = arith.addf %89, %118 : vector<2x256xf32>
    %c20 = arith.constant 20 : index
    %120 = memref.load %arg3[%c20] : memref<98xf32, #tpu.memory_space<smem>>
    %121 = vector.broadcast %120 : f32 to vector<2x256xf32>
    %122 = arith.mulf %121, %95 : vector<2x256xf32>
    %123 = arith.addf %93, %122 : vector<2x256xf32>
    %c0_35 = arith.constant 0 : index
    %c0_36 = arith.constant 0 : index
    %c128_37 = arith.constant 128 : index
    %124 = vector.load %arg5[%c0_35, %c0_36, %c128_37] : memref<2x2x512xf32, #tpu.memory_space<vmem>>, vector<1x2x256xf32>
    %125 = vector.shape_cast %124 : vector<1x2x256xf32> to vector<2x256xf32>
    %c21 = arith.constant 21 : index
    %126 = memref.load %arg3[%c21] : memref<98xf32, #tpu.memory_space<smem>>
    %127 = vector.broadcast %126 : f32 to vector<2x256xf32>
    %128 = arith.mulf %127, %125 : vector<2x256xf32>
    %129 = arith.addf %99, %128 : vector<2x256xf32>
    %c22 = arith.constant 22 : index
    %130 = memref.load %arg3[%c22] : memref<98xf32, #tpu.memory_space<smem>>
    %131 = vector.broadcast %130 : f32 to vector<2x256xf32>
    %132 = arith.mulf %131, %125 : vector<2x256xf32>
    %133 = arith.addf %103, %132 : vector<2x256xf32>
    %c23 = arith.constant 23 : index
    %134 = memref.load %arg3[%c23] : memref<98xf32, #tpu.memory_space<smem>>
    %135 = vector.broadcast %134 : f32 to vector<2x256xf32>
    %136 = arith.mulf %135, %125 : vector<2x256xf32>
    %137 = arith.addf %107, %136 : vector<2x256xf32>
    %c24 = arith.constant 24 : index
    %138 = memref.load %arg3[%c24] : memref<98xf32, #tpu.memory_space<smem>>
    %139 = vector.broadcast %138 : f32 to vector<2x256xf32>
    %140 = arith.mulf %139, %125 : vector<2x256xf32>
    %141 = arith.addf %111, %140 : vector<2x256xf32>
    %c25 = arith.constant 25 : index
    %142 = memref.load %arg3[%c25] : memref<98xf32, #tpu.memory_space<smem>>
    %143 = vector.broadcast %142 : f32 to vector<2x256xf32>
    %144 = arith.mulf %143, %125 : vector<2x256xf32>
    %145 = arith.addf %115, %144 : vector<2x256xf32>
    %c26 = arith.constant 26 : index
    %146 = memref.load %arg3[%c26] : memref<98xf32, #tpu.memory_space<smem>>
    %147 = vector.broadcast %146 : f32 to vector<2x256xf32>
    %148 = arith.mulf %147, %125 : vector<2x256xf32>
    %149 = arith.addf %119, %148 : vector<2x256xf32>
    %c27 = arith.constant 27 : index
    %150 = memref.load %arg3[%c27] : memref<98xf32, #tpu.memory_space<smem>>
    %151 = vector.broadcast %150 : f32 to vector<2x256xf32>
    %152 = arith.mulf %151, %125 : vector<2x256xf32>
    %153 = arith.addf %123, %152 : vector<2x256xf32>
    %c0_38 = arith.constant 0 : index
    %c0_39 = arith.constant 0 : index
    %c144 = arith.constant 144 : index
    %154 = vector.load %arg5[%c0_38, %c0_39, %c144] : memref<2x2x512xf32, #tpu.memory_space<vmem>>, vector<1x2x256xf32>
    %155 = vector.shape_cast %154 : vector<1x2x256xf32> to vector<2x256xf32>
    %c28 = arith.constant 28 : index
    %156 = memref.load %arg3[%c28] : memref<98xf32, #tpu.memory_space<smem>>
    %157 = vector.broadcast %156 : f32 to vector<2x256xf32>
    %158 = arith.mulf %157, %155 : vector<2x256xf32>
    %159 = arith.addf %129, %158 : vector<2x256xf32>
    %c29 = arith.constant 29 : index
    %160 = memref.load %arg3[%c29] : memref<98xf32, #tpu.memory_space<smem>>
    %161 = vector.broadcast %160 : f32 to vector<2x256xf32>
    %162 = arith.mulf %161, %155 : vector<2x256xf32>
    %163 = arith.addf %133, %162 : vector<2x256xf32>
    %c30 = arith.constant 30 : index
    %164 = memref.load %arg3[%c30] : memref<98xf32, #tpu.memory_space<smem>>
    %165 = vector.broadcast %164 : f32 to vector<2x256xf32>
    %166 = arith.mulf %165, %155 : vector<2x256xf32>
    %167 = arith.addf %137, %166 : vector<2x256xf32>
    %c31 = arith.constant 31 : index
    %168 = memref.load %arg3[%c31] : memref<98xf32, #tpu.memory_space<smem>>
    %169 = vector.broadcast %168 : f32 to vector<2x256xf32>
    %170 = arith.mulf %169, %155 : vector<2x256xf32>
    %171 = arith.addf %141, %170 : vector<2x256xf32>
    %c32 = arith.constant 32 : index
    %172 = memref.load %arg3[%c32] : memref<98xf32, #tpu.memory_space<smem>>
    %173 = vector.broadcast %172 : f32 to vector<2x256xf32>
    %174 = arith.mulf %173, %155 : vector<2x256xf32>
    %175 = arith.addf %145, %174 : vector<2x256xf32>
    %c33 = arith.constant 33 : index
    %176 = memref.load %arg3[%c33] : memref<98xf32, #tpu.memory_space<smem>>
    %177 = vector.broadcast %176 : f32 to vector<2x256xf32>
    %178 = arith.mulf %177, %155 : vector<2x256xf32>
    %179 = arith.addf %149, %178 : vector<2x256xf32>
    %c34 = arith.constant 34 : index
    %180 = memref.load %arg3[%c34] : memref<98xf32, #tpu.memory_space<smem>>
    %181 = vector.broadcast %180 : f32 to vector<2x256xf32>
    %182 = arith.mulf %181, %155 : vector<2x256xf32>
    %183 = arith.addf %153, %182 : vector<2x256xf32>
    %c0_40 = arith.constant 0 : index
    %c0_41 = arith.constant 0 : index
    %c160 = arith.constant 160 : index
    %184 = vector.load %arg5[%c0_40, %c0_41, %c160] : memref<2x2x512xf32, #tpu.memory_space<vmem>>, vector<1x2x256xf32>
    %185 = vector.shape_cast %184 : vector<1x2x256xf32> to vector<2x256xf32>
    %c35 = arith.constant 35 : index
    %186 = memref.load %arg3[%c35] : memref<98xf32, #tpu.memory_space<smem>>
    %187 = vector.broadcast %186 : f32 to vector<2x256xf32>
    %188 = arith.mulf %187, %185 : vector<2x256xf32>
    %189 = arith.addf %159, %188 : vector<2x256xf32>
    %c36 = arith.constant 36 : index
    %190 = memref.load %arg3[%c36] : memref<98xf32, #tpu.memory_space<smem>>
    %191 = vector.broadcast %190 : f32 to vector<2x256xf32>
    %192 = arith.mulf %191, %185 : vector<2x256xf32>
    %193 = arith.addf %163, %192 : vector<2x256xf32>
    %c37 = arith.constant 37 : index
    %194 = memref.load %arg3[%c37] : memref<98xf32, #tpu.memory_space<smem>>
    %195 = vector.broadcast %194 : f32 to vector<2x256xf32>
    %196 = arith.mulf %195, %185 : vector<2x256xf32>
    %197 = arith.addf %167, %196 : vector<2x256xf32>
    %c38 = arith.constant 38 : index
    %198 = memref.load %arg3[%c38] : memref<98xf32, #tpu.memory_space<smem>>
    %199 = vector.broadcast %198 : f32 to vector<2x256xf32>
    %200 = arith.mulf %199, %185 : vector<2x256xf32>
    %201 = arith.addf %171, %200 : vector<2x256xf32>
    %c39 = arith.constant 39 : index
    %202 = memref.load %arg3[%c39] : memref<98xf32, #tpu.memory_space<smem>>
    %203 = vector.broadcast %202 : f32 to vector<2x256xf32>
    %204 = arith.mulf %203, %185 : vector<2x256xf32>
    %205 = arith.addf %175, %204 : vector<2x256xf32>
    %c40 = arith.constant 40 : index
    %206 = memref.load %arg3[%c40] : memref<98xf32, #tpu.memory_space<smem>>
    %207 = vector.broadcast %206 : f32 to vector<2x256xf32>
    %208 = arith.mulf %207, %185 : vector<2x256xf32>
    %209 = arith.addf %179, %208 : vector<2x256xf32>
    %c41 = arith.constant 41 : index
    %210 = memref.load %arg3[%c41] : memref<98xf32, #tpu.memory_space<smem>>
    %211 = vector.broadcast %210 : f32 to vector<2x256xf32>
    %212 = arith.mulf %211, %185 : vector<2x256xf32>
    %213 = arith.addf %183, %212 : vector<2x256xf32>
    %c0_42 = arith.constant 0 : index
    %c0_43 = arith.constant 0 : index
    %c176 = arith.constant 176 : index
    %214 = vector.load %arg5[%c0_42, %c0_43, %c176] : memref<2x2x512xf32, #tpu.memory_space<vmem>>, vector<1x2x256xf32>
    %215 = vector.shape_cast %214 : vector<1x2x256xf32> to vector<2x256xf32>
    %c42 = arith.constant 42 : index
    %216 = memref.load %arg3[%c42] : memref<98xf32, #tpu.memory_space<smem>>
    %217 = vector.broadcast %216 : f32 to vector<2x256xf32>
    %218 = arith.mulf %217, %215 : vector<2x256xf32>
    %219 = arith.addf %189, %218 : vector<2x256xf32>
    %c43 = arith.constant 43 : index
    %220 = memref.load %arg3[%c43] : memref<98xf32, #tpu.memory_space<smem>>
    %221 = vector.broadcast %220 : f32 to vector<2x256xf32>
    %222 = arith.mulf %221, %215 : vector<2x256xf32>
    %223 = arith.addf %193, %222 : vector<2x256xf32>
    %c44 = arith.constant 44 : index
    %224 = memref.load %arg3[%c44] : memref<98xf32, #tpu.memory_space<smem>>
    %225 = vector.broadcast %224 : f32 to vector<2x256xf32>
    %226 = arith.mulf %225, %215 : vector<2x256xf32>
    %227 = arith.addf %197, %226 : vector<2x256xf32>
    %c45 = arith.constant 45 : index
    %228 = memref.load %arg3[%c45] : memref<98xf32, #tpu.memory_space<smem>>
    %229 = vector.broadcast %228 : f32 to vector<2x256xf32>
    %230 = arith.mulf %229, %215 : vector<2x256xf32>
    %231 = arith.addf %201, %230 : vector<2x256xf32>
    %c46 = arith.constant 46 : index
    %232 = memref.load %arg3[%c46] : memref<98xf32, #tpu.memory_space<smem>>
    %233 = vector.broadcast %232 : f32 to vector<2x256xf32>
    %234 = arith.mulf %233, %215 : vector<2x256xf32>
    %235 = arith.addf %205, %234 : vector<2x256xf32>
    %c47 = arith.constant 47 : index
    %236 = memref.load %arg3[%c47] : memref<98xf32, #tpu.memory_space<smem>>
    %237 = vector.broadcast %236 : f32 to vector<2x256xf32>
    %238 = arith.mulf %237, %215 : vector<2x256xf32>
    %239 = arith.addf %209, %238 : vector<2x256xf32>
    %c48 = arith.constant 48 : index
    %240 = memref.load %arg3[%c48] : memref<98xf32, #tpu.memory_space<smem>>
    %241 = vector.broadcast %240 : f32 to vector<2x256xf32>
    %242 = arith.mulf %241, %215 : vector<2x256xf32>
    %243 = arith.addf %213, %242 : vector<2x256xf32>
    %c1_44 = arith.constant 1 : index
    %c0_45 = arith.constant 0 : index
    %c80_46 = arith.constant 80 : index
    %244 = vector.load %arg5[%c1_44, %c0_45, %c80_46] : memref<2x2x512xf32, #tpu.memory_space<vmem>>, vector<1x2x256xf32>
    %245 = vector.shape_cast %244 : vector<1x2x256xf32> to vector<2x256xf32>
    %c49 = arith.constant 49 : index
    %246 = memref.load %arg3[%c49] : memref<98xf32, #tpu.memory_space<smem>>
    %247 = vector.broadcast %246 : f32 to vector<2x256xf32>
    %248 = arith.mulf %247, %245 : vector<2x256xf32>
    %249 = arith.addf %219, %248 : vector<2x256xf32>
    %c50 = arith.constant 50 : index
    %250 = memref.load %arg3[%c50] : memref<98xf32, #tpu.memory_space<smem>>
    %251 = vector.broadcast %250 : f32 to vector<2x256xf32>
    %252 = arith.mulf %251, %245 : vector<2x256xf32>
    %253 = arith.addf %223, %252 : vector<2x256xf32>
    %c51 = arith.constant 51 : index
    %254 = memref.load %arg3[%c51] : memref<98xf32, #tpu.memory_space<smem>>
    %255 = vector.broadcast %254 : f32 to vector<2x256xf32>
    %256 = arith.mulf %255, %245 : vector<2x256xf32>
    %257 = arith.addf %227, %256 : vector<2x256xf32>
    %c52 = arith.constant 52 : index
    %258 = memref.load %arg3[%c52] : memref<98xf32, #tpu.memory_space<smem>>
    %259 = vector.broadcast %258 : f32 to vector<2x256xf32>
    %260 = arith.mulf %259, %245 : vector<2x256xf32>
    %261 = arith.addf %231, %260 : vector<2x256xf32>
    %c53 = arith.constant 53 : index
    %262 = memref.load %arg3[%c53] : memref<98xf32, #tpu.memory_space<smem>>
    %263 = vector.broadcast %262 : f32 to vector<2x256xf32>
    %264 = arith.mulf %263, %245 : vector<2x256xf32>
    %265 = arith.addf %235, %264 : vector<2x256xf32>
    %c54 = arith.constant 54 : index
    %266 = memref.load %arg3[%c54] : memref<98xf32, #tpu.memory_space<smem>>
    %267 = vector.broadcast %266 : f32 to vector<2x256xf32>
    %268 = arith.mulf %267, %245 : vector<2x256xf32>
    %269 = arith.addf %239, %268 : vector<2x256xf32>
    %c55 = arith.constant 55 : index
    %270 = memref.load %arg3[%c55] : memref<98xf32, #tpu.memory_space<smem>>
    %271 = vector.broadcast %270 : f32 to vector<2x256xf32>
    %272 = arith.mulf %271, %245 : vector<2x256xf32>
    %273 = arith.addf %243, %272 : vector<2x256xf32>
    %c1_47 = arith.constant 1 : index
    %c0_48 = arith.constant 0 : index
    %c96_49 = arith.constant 96 : index
    %274 = vector.load %arg5[%c1_47, %c0_48, %c96_49] : memref<2x2x512xf32, #tpu.memory_space<vmem>>, vector<1x2x256xf32>
    %275 = vector.shape_cast %274 : vector<1x2x256xf32> to vector<2x256xf32>
    %c56 = arith.constant 56 : index
    %276 = memref.load %arg3[%c56] : memref<98xf32, #tpu.memory_space<smem>>
    %277 = vector.broadcast %276 : f32 to vector<2x256xf32>
    %278 = arith.mulf %277, %275 : vector<2x256xf32>
    %279 = arith.addf %249, %278 : vector<2x256xf32>
    %c57 = arith.constant 57 : index
    %280 = memref.load %arg3[%c57] : memref<98xf32, #tpu.memory_space<smem>>
    %281 = vector.broadcast %280 : f32 to vector<2x256xf32>
    %282 = arith.mulf %281, %275 : vector<2x256xf32>
    %283 = arith.addf %253, %282 : vector<2x256xf32>
    %c58 = arith.constant 58 : index
    %284 = memref.load %arg3[%c58] : memref<98xf32, #tpu.memory_space<smem>>
    %285 = vector.broadcast %284 : f32 to vector<2x256xf32>
    %286 = arith.mulf %285, %275 : vector<2x256xf32>
    %287 = arith.addf %257, %286 : vector<2x256xf32>
    %c59 = arith.constant 59 : index
    %288 = memref.load %arg3[%c59] : memref<98xf32, #tpu.memory_space<smem>>
    %289 = vector.broadcast %288 : f32 to vector<2x256xf32>
    %290 = arith.mulf %289, %275 : vector<2x256xf32>
    %291 = arith.addf %261, %290 : vector<2x256xf32>
    %c60 = arith.constant 60 : index
    %292 = memref.load %arg3[%c60] : memref<98xf32, #tpu.memory_space<smem>>
    %293 = vector.broadcast %292 : f32 to vector<2x256xf32>
    %294 = arith.mulf %293, %275 : vector<2x256xf32>
    %295 = arith.addf %265, %294 : vector<2x256xf32>
    %c61 = arith.constant 61 : index
    %296 = memref.load %arg3[%c61] : memref<98xf32, #tpu.memory_space<smem>>
    %297 = vector.broadcast %296 : f32 to vector<2x256xf32>
    %298 = arith.mulf %297, %275 : vector<2x256xf32>
    %299 = arith.addf %269, %298 : vector<2x256xf32>
    %c62 = arith.constant 62 : index
    %300 = memref.load %arg3[%c62] : memref<98xf32, #tpu.memory_space<smem>>
    %301 = vector.broadcast %300 : f32 to vector<2x256xf32>
    %302 = arith.mulf %301, %275 : vector<2x256xf32>
    %303 = arith.addf %273, %302 : vector<2x256xf32>
    %c1_50 = arith.constant 1 : index
    %c0_51 = arith.constant 0 : index
    %c112_52 = arith.constant 112 : index
    %304 = vector.load %arg5[%c1_50, %c0_51, %c112_52] : memref<2x2x512xf32, #tpu.memory_space<vmem>>, vector<1x2x256xf32>
    %305 = vector.shape_cast %304 : vector<1x2x256xf32> to vector<2x256xf32>
    %c63 = arith.constant 63 : index
    %306 = memref.load %arg3[%c63] : memref<98xf32, #tpu.memory_space<smem>>
    %307 = vector.broadcast %306 : f32 to vector<2x256xf32>
    %308 = arith.mulf %307, %305 : vector<2x256xf32>
    %309 = arith.addf %279, %308 : vector<2x256xf32>
    %c64 = arith.constant 64 : index
    %310 = memref.load %arg3[%c64] : memref<98xf32, #tpu.memory_space<smem>>
    %311 = vector.broadcast %310 : f32 to vector<2x256xf32>
    %312 = arith.mulf %311, %305 : vector<2x256xf32>
    %313 = arith.addf %283, %312 : vector<2x256xf32>
    %c65 = arith.constant 65 : index
    %314 = memref.load %arg3[%c65] : memref<98xf32, #tpu.memory_space<smem>>
    %315 = vector.broadcast %314 : f32 to vector<2x256xf32>
    %316 = arith.mulf %315, %305 : vector<2x256xf32>
    %317 = arith.addf %287, %316 : vector<2x256xf32>
    %c66 = arith.constant 66 : index
    %318 = memref.load %arg3[%c66] : memref<98xf32, #tpu.memory_space<smem>>
    %319 = vector.broadcast %318 : f32 to vector<2x256xf32>
    %320 = arith.mulf %319, %305 : vector<2x256xf32>
    %321 = arith.addf %291, %320 : vector<2x256xf32>
    %c67 = arith.constant 67 : index
    %322 = memref.load %arg3[%c67] : memref<98xf32, #tpu.memory_space<smem>>
    %323 = vector.broadcast %322 : f32 to vector<2x256xf32>
    %324 = arith.mulf %323, %305 : vector<2x256xf32>
    %325 = arith.addf %295, %324 : vector<2x256xf32>
    %c68 = arith.constant 68 : index
    %326 = memref.load %arg3[%c68] : memref<98xf32, #tpu.memory_space<smem>>
    %327 = vector.broadcast %326 : f32 to vector<2x256xf32>
    %328 = arith.mulf %327, %305 : vector<2x256xf32>
    %329 = arith.addf %299, %328 : vector<2x256xf32>
    %c69 = arith.constant 69 : index
    %330 = memref.load %arg3[%c69] : memref<98xf32, #tpu.memory_space<smem>>
    %331 = vector.broadcast %330 : f32 to vector<2x256xf32>
    %332 = arith.mulf %331, %305 : vector<2x256xf32>
    %333 = arith.addf %303, %332 : vector<2x256xf32>
    %c1_53 = arith.constant 1 : index
    %c0_54 = arith.constant 0 : index
    %c128_55 = arith.constant 128 : index
    %334 = vector.load %arg5[%c1_53, %c0_54, %c128_55] : memref<2x2x512xf32, #tpu.memory_space<vmem>>, vector<1x2x256xf32>
    %335 = vector.shape_cast %334 : vector<1x2x256xf32> to vector<2x256xf32>
    %c70 = arith.constant 70 : index
    %336 = memref.load %arg3[%c70] : memref<98xf32, #tpu.memory_space<smem>>
    %337 = vector.broadcast %336 : f32 to vector<2x256xf32>
    %338 = arith.mulf %337, %335 : vector<2x256xf32>
    %339 = arith.addf %309, %338 : vector<2x256xf32>
    %c71 = arith.constant 71 : index
    %340 = memref.load %arg3[%c71] : memref<98xf32, #tpu.memory_space<smem>>
    %341 = vector.broadcast %340 : f32 to vector<2x256xf32>
    %342 = arith.mulf %341, %335 : vector<2x256xf32>
    %343 = arith.addf %313, %342 : vector<2x256xf32>
    %c72 = arith.constant 72 : index
    %344 = memref.load %arg3[%c72] : memref<98xf32, #tpu.memory_space<smem>>
    %345 = vector.broadcast %344 : f32 to vector<2x256xf32>
    %346 = arith.mulf %345, %335 : vector<2x256xf32>
    %347 = arith.addf %317, %346 : vector<2x256xf32>
    %c73 = arith.constant 73 : index
    %348 = memref.load %arg3[%c73] : memref<98xf32, #tpu.memory_space<smem>>
    %349 = vector.broadcast %348 : f32 to vector<2x256xf32>
    %350 = arith.mulf %349, %335 : vector<2x256xf32>
    %351 = arith.addf %321, %350 : vector<2x256xf32>
    %c74 = arith.constant 74 : index
    %352 = memref.load %arg3[%c74] : memref<98xf32, #tpu.memory_space<smem>>
    %353 = vector.broadcast %352 : f32 to vector<2x256xf32>
    %354 = arith.mulf %353, %335 : vector<2x256xf32>
    %355 = arith.addf %325, %354 : vector<2x256xf32>
    %c75 = arith.constant 75 : index
    %356 = memref.load %arg3[%c75] : memref<98xf32, #tpu.memory_space<smem>>
    %357 = vector.broadcast %356 : f32 to vector<2x256xf32>
    %358 = arith.mulf %357, %335 : vector<2x256xf32>
    %359 = arith.addf %329, %358 : vector<2x256xf32>
    %c76 = arith.constant 76 : index
    %360 = memref.load %arg3[%c76] : memref<98xf32, #tpu.memory_space<smem>>
    %361 = vector.broadcast %360 : f32 to vector<2x256xf32>
    %362 = arith.mulf %361, %335 : vector<2x256xf32>
    %363 = arith.addf %333, %362 : vector<2x256xf32>
    %c1_56 = arith.constant 1 : index
    %c0_57 = arith.constant 0 : index
    %c144_58 = arith.constant 144 : index
    %364 = vector.load %arg5[%c1_56, %c0_57, %c144_58] : memref<2x2x512xf32, #tpu.memory_space<vmem>>, vector<1x2x256xf32>
    %365 = vector.shape_cast %364 : vector<1x2x256xf32> to vector<2x256xf32>
    %c77 = arith.constant 77 : index
    %366 = memref.load %arg3[%c77] : memref<98xf32, #tpu.memory_space<smem>>
    %367 = vector.broadcast %366 : f32 to vector<2x256xf32>
    %368 = arith.mulf %367, %365 : vector<2x256xf32>
    %369 = arith.addf %339, %368 : vector<2x256xf32>
    %c78 = arith.constant 78 : index
    %370 = memref.load %arg3[%c78] : memref<98xf32, #tpu.memory_space<smem>>
    %371 = vector.broadcast %370 : f32 to vector<2x256xf32>
    %372 = arith.mulf %371, %365 : vector<2x256xf32>
    %373 = arith.addf %343, %372 : vector<2x256xf32>
    %c79 = arith.constant 79 : index
    %374 = memref.load %arg3[%c79] : memref<98xf32, #tpu.memory_space<smem>>
    %375 = vector.broadcast %374 : f32 to vector<2x256xf32>
    %376 = arith.mulf %375, %365 : vector<2x256xf32>
    %377 = arith.addf %347, %376 : vector<2x256xf32>
    %c80_59 = arith.constant 80 : index
    %378 = memref.load %arg3[%c80_59] : memref<98xf32, #tpu.memory_space<smem>>
    %379 = vector.broadcast %378 : f32 to vector<2x256xf32>
    %380 = arith.mulf %379, %365 : vector<2x256xf32>
    %381 = arith.addf %351, %380 : vector<2x256xf32>
    %c81 = arith.constant 81 : index
    %382 = memref.load %arg3[%c81] : memref<98xf32, #tpu.memory_space<smem>>
    %383 = vector.broadcast %382 : f32 to vector<2x256xf32>
    %384 = arith.mulf %383, %365 : vector<2x256xf32>
    %385 = arith.addf %355, %384 : vector<2x256xf32>
    %c82 = arith.constant 82 : index
    %386 = memref.load %arg3[%c82] : memref<98xf32, #tpu.memory_space<smem>>
    %387 = vector.broadcast %386 : f32 to vector<2x256xf32>
    %388 = arith.mulf %387, %365 : vector<2x256xf32>
    %389 = arith.addf %359, %388 : vector<2x256xf32>
    %c83 = arith.constant 83 : index
    %390 = memref.load %arg3[%c83] : memref<98xf32, #tpu.memory_space<smem>>
    %391 = vector.broadcast %390 : f32 to vector<2x256xf32>
    %392 = arith.mulf %391, %365 : vector<2x256xf32>
    %393 = arith.addf %363, %392 : vector<2x256xf32>
    %c1_60 = arith.constant 1 : index
    %c0_61 = arith.constant 0 : index
    %c160_62 = arith.constant 160 : index
    %394 = vector.load %arg5[%c1_60, %c0_61, %c160_62] : memref<2x2x512xf32, #tpu.memory_space<vmem>>, vector<1x2x256xf32>
    %395 = vector.shape_cast %394 : vector<1x2x256xf32> to vector<2x256xf32>
    %c84 = arith.constant 84 : index
    %396 = memref.load %arg3[%c84] : memref<98xf32, #tpu.memory_space<smem>>
    %397 = vector.broadcast %396 : f32 to vector<2x256xf32>
    %398 = arith.mulf %397, %395 : vector<2x256xf32>
    %399 = arith.addf %369, %398 : vector<2x256xf32>
    %c85 = arith.constant 85 : index
    %400 = memref.load %arg3[%c85] : memref<98xf32, #tpu.memory_space<smem>>
    %401 = vector.broadcast %400 : f32 to vector<2x256xf32>
    %402 = arith.mulf %401, %395 : vector<2x256xf32>
    %403 = arith.addf %373, %402 : vector<2x256xf32>
    %c86 = arith.constant 86 : index
    %404 = memref.load %arg3[%c86] : memref<98xf32, #tpu.memory_space<smem>>
    %405 = vector.broadcast %404 : f32 to vector<2x256xf32>
    %406 = arith.mulf %405, %395 : vector<2x256xf32>
    %407 = arith.addf %377, %406 : vector<2x256xf32>
    %c87 = arith.constant 87 : index
    %408 = memref.load %arg3[%c87] : memref<98xf32, #tpu.memory_space<smem>>
    %409 = vector.broadcast %408 : f32 to vector<2x256xf32>
    %410 = arith.mulf %409, %395 : vector<2x256xf32>
    %411 = arith.addf %381, %410 : vector<2x256xf32>
    %c88 = arith.constant 88 : index
    %412 = memref.load %arg3[%c88] : memref<98xf32, #tpu.memory_space<smem>>
    %413 = vector.broadcast %412 : f32 to vector<2x256xf32>
    %414 = arith.mulf %413, %395 : vector<2x256xf32>
    %415 = arith.addf %385, %414 : vector<2x256xf32>
    %c89 = arith.constant 89 : index
    %416 = memref.load %arg3[%c89] : memref<98xf32, #tpu.memory_space<smem>>
    %417 = vector.broadcast %416 : f32 to vector<2x256xf32>
    %418 = arith.mulf %417, %395 : vector<2x256xf32>
    %419 = arith.addf %389, %418 : vector<2x256xf32>
    %c90 = arith.constant 90 : index
    %420 = memref.load %arg3[%c90] : memref<98xf32, #tpu.memory_space<smem>>
    %421 = vector.broadcast %420 : f32 to vector<2x256xf32>
    %422 = arith.mulf %421, %395 : vector<2x256xf32>
    %423 = arith.addf %393, %422 : vector<2x256xf32>
    %c1_63 = arith.constant 1 : index
    %c0_64 = arith.constant 0 : index
    %c176_65 = arith.constant 176 : index
    %424 = vector.load %arg5[%c1_63, %c0_64, %c176_65] : memref<2x2x512xf32, #tpu.memory_space<vmem>>, vector<1x2x256xf32>
    %425 = vector.shape_cast %424 : vector<1x2x256xf32> to vector<2x256xf32>
    %c91 = arith.constant 91 : index
    %426 = memref.load %arg3[%c91] : memref<98xf32, #tpu.memory_space<smem>>
    %427 = vector.broadcast %426 : f32 to vector<2x256xf32>
    %428 = arith.mulf %427, %425 : vector<2x256xf32>
    %429 = arith.addf %399, %428 : vector<2x256xf32>
    %c92 = arith.constant 92 : index
    %430 = memref.load %arg3[%c92] : memref<98xf32, #tpu.memory_space<smem>>
    %431 = vector.broadcast %430 : f32 to vector<2x256xf32>
    %432 = arith.mulf %431, %425 : vector<2x256xf32>
    %433 = arith.addf %403, %432 : vector<2x256xf32>
    %c93 = arith.constant 93 : index
    %434 = memref.load %arg3[%c93] : memref<98xf32, #tpu.memory_space<smem>>
    %435 = vector.broadcast %434 : f32 to vector<2x256xf32>
    %436 = arith.mulf %435, %425 : vector<2x256xf32>
    %437 = arith.addf %407, %436 : vector<2x256xf32>
    %c94 = arith.constant 94 : index
    %438 = memref.load %arg3[%c94] : memref<98xf32, #tpu.memory_space<smem>>
    %439 = vector.broadcast %438 : f32 to vector<2x256xf32>
    %440 = arith.mulf %439, %425 : vector<2x256xf32>
    %441 = arith.addf %411, %440 : vector<2x256xf32>
    %c95 = arith.constant 95 : index
    %442 = memref.load %arg3[%c95] : memref<98xf32, #tpu.memory_space<smem>>
    %443 = vector.broadcast %442 : f32 to vector<2x256xf32>
    %444 = arith.mulf %443, %425 : vector<2x256xf32>
    %445 = arith.addf %415, %444 : vector<2x256xf32>
    %c96_66 = arith.constant 96 : index
    %446 = memref.load %arg3[%c96_66] : memref<98xf32, #tpu.memory_space<smem>>
    %447 = vector.broadcast %446 : f32 to vector<2x256xf32>
    %448 = arith.mulf %447, %425 : vector<2x256xf32>
    %449 = arith.addf %419, %448 : vector<2x256xf32>
    %c97 = arith.constant 97 : index
    %450 = memref.load %arg3[%c97] : memref<98xf32, #tpu.memory_space<smem>>
    %451 = vector.broadcast %450 : f32 to vector<2x256xf32>
    %452 = arith.mulf %451, %425 : vector<2x256xf32>
    %453 = arith.addf %423, %452 : vector<2x256xf32>
    %c3_i32 = arith.constant 3 : i32
    %454 = tpu.dynamic_rotate %429 by %c3_i32 dim 1 : vector<2x256xf32>, i32 -> vector<2x256xf32>
    %c-3_i32 = arith.constant -3 : i32
    %455 = vector.broadcast %c-3_i32 : i32 to vector<2x256xi32>
    %456 = arith.addi %26, %455 : vector<2x256xi32>
    %c0_i32 = arith.constant 0 : i32
    %457 = vector.broadcast %c0_i32 : i32 to vector<2x256xi32>
    %458 = arith.cmpi sge, %456, %457 : vector<2x256xi32>
    %c-3_i32_67 = arith.constant -3 : i32
    %459 = vector.broadcast %c-3_i32_67 : i32 to vector<2x256xi32>
    %460 = arith.addi %26, %459 : vector<2x256xi32>
    %c16_i32 = arith.constant 16 : i32
    %461 = vector.broadcast %c16_i32 : i32 to vector<2x256xi32>
    %462 = arith.cmpi slt, %460, %461 : vector<2x256xi32>
    %463 = arith.andi %458, %462 : vector<2x256xi1>
    %cst_68 = arith.constant 0.000000e+00 : f32
    %464 = vector.broadcast %cst_68 : f32 to vector<2x256xf32>
    %465 = arith.select %463, %454, %464 : vector<2x256xi1>, vector<2x256xf32>
    %466 = arith.addf %441, %465 : vector<2x256xf32>
    %c2_i32 = arith.constant 2 : i32
    %467 = tpu.dynamic_rotate %433 by %c2_i32 dim 1 : vector<2x256xf32>, i32 -> vector<2x256xf32>
    %c-2_i32 = arith.constant -2 : i32
    %468 = vector.broadcast %c-2_i32 : i32 to vector<2x256xi32>
    %469 = arith.addi %26, %468 : vector<2x256xi32>
    %c0_i32_69 = arith.constant 0 : i32
    %470 = vector.broadcast %c0_i32_69 : i32 to vector<2x256xi32>
    %471 = arith.cmpi sge, %469, %470 : vector<2x256xi32>
    %c-2_i32_70 = arith.constant -2 : i32
    %472 = vector.broadcast %c-2_i32_70 : i32 to vector<2x256xi32>
    %473 = arith.addi %26, %472 : vector<2x256xi32>
    %c16_i32_71 = arith.constant 16 : i32
    %474 = vector.broadcast %c16_i32_71 : i32 to vector<2x256xi32>
    %475 = arith.cmpi slt, %473, %474 : vector<2x256xi32>
    %476 = arith.andi %471, %475 : vector<2x256xi1>
    %cst_72 = arith.constant 0.000000e+00 : f32
    %477 = vector.broadcast %cst_72 : f32 to vector<2x256xf32>
    %478 = arith.select %476, %467, %477 : vector<2x256xi1>, vector<2x256xf32>
    %479 = arith.addf %466, %478 : vector<2x256xf32>
    %c1_i32 = arith.constant 1 : i32
    %480 = tpu.dynamic_rotate %437 by %c1_i32 dim 1 : vector<2x256xf32>, i32 -> vector<2x256xf32>
    %c-1_i32 = arith.constant -1 : i32
    %481 = vector.broadcast %c-1_i32 : i32 to vector<2x256xi32>
    %482 = arith.addi %26, %481 : vector<2x256xi32>
    %c0_i32_73 = arith.constant 0 : i32
    %483 = vector.broadcast %c0_i32_73 : i32 to vector<2x256xi32>
    %484 = arith.cmpi sge, %482, %483 : vector<2x256xi32>
    %c-1_i32_74 = arith.constant -1 : i32
    %485 = vector.broadcast %c-1_i32_74 : i32 to vector<2x256xi32>
    %486 = arith.addi %26, %485 : vector<2x256xi32>
    %c16_i32_75 = arith.constant 16 : i32
    %487 = vector.broadcast %c16_i32_75 : i32 to vector<2x256xi32>
    %488 = arith.cmpi slt, %486, %487 : vector<2x256xi32>
    %489 = arith.andi %484, %488 : vector<2x256xi1>
    %cst_76 = arith.constant 0.000000e+00 : f32
    %490 = vector.broadcast %cst_76 : f32 to vector<2x256xf32>
    %491 = arith.select %489, %480, %490 : vector<2x256xi1>, vector<2x256xf32>
    %492 = arith.addf %479, %491 : vector<2x256xf32>
    %c255_i32 = arith.constant 255 : i32
    %493 = tpu.dynamic_rotate %445 by %c255_i32 dim 1 : vector<2x256xf32>, i32 -> vector<2x256xf32>
    %c1_i32_77 = arith.constant 1 : i32
    %494 = vector.broadcast %c1_i32_77 : i32 to vector<2x256xi32>
    %495 = arith.addi %26, %494 : vector<2x256xi32>
    %c0_i32_78 = arith.constant 0 : i32
    %496 = vector.broadcast %c0_i32_78 : i32 to vector<2x256xi32>
    %497 = arith.cmpi sge, %495, %496 : vector<2x256xi32>
    %c1_i32_79 = arith.constant 1 : i32
    %498 = vector.broadcast %c1_i32_79 : i32 to vector<2x256xi32>
    %499 = arith.addi %26, %498 : vector<2x256xi32>
    %c16_i32_80 = arith.constant 16 : i32
    %500 = vector.broadcast %c16_i32_80 : i32 to vector<2x256xi32>
    %501 = arith.cmpi slt, %499, %500 : vector<2x256xi32>
    %502 = arith.andi %497, %501 : vector<2x256xi1>
    %cst_81 = arith.constant 0.000000e+00 : f32
    %503 = vector.broadcast %cst_81 : f32 to vector<2x256xf32>
    %504 = arith.select %502, %493, %503 : vector<2x256xi1>, vector<2x256xf32>
    %505 = arith.addf %492, %504 : vector<2x256xf32>
    %c254_i32 = arith.constant 254 : i32
    %506 = tpu.dynamic_rotate %449 by %c254_i32 dim 1 : vector<2x256xf32>, i32 -> vector<2x256xf32>
    %c2_i32_82 = arith.constant 2 : i32
    %507 = vector.broadcast %c2_i32_82 : i32 to vector<2x256xi32>
    %508 = arith.addi %26, %507 : vector<2x256xi32>
    %c0_i32_83 = arith.constant 0 : i32
    %509 = vector.broadcast %c0_i32_83 : i32 to vector<2x256xi32>
    %510 = arith.cmpi sge, %508, %509 : vector<2x256xi32>
    %c2_i32_84 = arith.constant 2 : i32
    %511 = vector.broadcast %c2_i32_84 : i32 to vector<2x256xi32>
    %512 = arith.addi %26, %511 : vector<2x256xi32>
    %c16_i32_85 = arith.constant 16 : i32
    %513 = vector.broadcast %c16_i32_85 : i32 to vector<2x256xi32>
    %514 = arith.cmpi slt, %512, %513 : vector<2x256xi32>
    %515 = arith.andi %510, %514 : vector<2x256xi1>
    %cst_86 = arith.constant 0.000000e+00 : f32
    %516 = vector.broadcast %cst_86 : f32 to vector<2x256xf32>
    %517 = arith.select %515, %506, %516 : vector<2x256xi1>, vector<2x256xf32>
    %518 = arith.addf %505, %517 : vector<2x256xf32>
    %c253_i32 = arith.constant 253 : i32
    %519 = tpu.dynamic_rotate %453 by %c253_i32 dim 1 : vector<2x256xf32>, i32 -> vector<2x256xf32>
    %c3_i32_87 = arith.constant 3 : i32
    %520 = vector.broadcast %c3_i32_87 : i32 to vector<2x256xi32>
    %521 = arith.addi %26, %520 : vector<2x256xi32>
    %c0_i32_88 = arith.constant 0 : i32
    %522 = vector.broadcast %c0_i32_88 : i32 to vector<2x256xi32>
    %523 = arith.cmpi sge, %521, %522 : vector<2x256xi32>
    %c3_i32_89 = arith.constant 3 : i32
    %524 = vector.broadcast %c3_i32_89 : i32 to vector<2x256xi32>
    %525 = arith.addi %26, %524 : vector<2x256xi32>
    %c16_i32_90 = arith.constant 16 : i32
    %526 = vector.broadcast %c16_i32_90 : i32 to vector<2x256xi32>
    %527 = arith.cmpi slt, %525, %526 : vector<2x256xi32>
    %528 = arith.andi %523, %527 : vector<2x256xi1>
    %cst_91 = arith.constant 0.000000e+00 : f32
    %529 = vector.broadcast %cst_91 : f32 to vector<2x256xf32>
    %530 = arith.select %528, %519, %529 : vector<2x256xi1>, vector<2x256xf32>
    %531 = arith.addf %518, %530 : vector<2x256xf32>
    %532 = arith.negf %531 : vector<2x256xf32>
    %533 = math.exp %532 : vector<2x256xf32>
    %cst_92 = arith.constant 1.000000e+00 : f32
    %534 = vector.broadcast %cst_92 : f32 to vector<2x256xf32>
    %535 = arith.addf %534, %533 : vector<2x256xf32>
    %536 = arith.divf %534, %535 : vector<2x256xf32>
    %c0_93 = arith.constant 0 : index
    %c0_94 = arith.constant 0 : index
    %537 = vector.load %arg4[%c0_93, %c0_94] : memref<2x256xf32, #tpu.memory_space<vmem>>, vector<2x256xf32>
    tpu.vector_store %arg4[%c0_93, %c0_94], %536 {strides = array<i32>} : memref<2x256xf32, #tpu.memory_space<vmem>>, vector<2x256xf32>,
    return
  }
  func.func @transform_0(%arg0: i32, %arg1: i32) -> (i32, i32, i32) {
    %c0_i32 = arith.constant 0 : i32
    %c0_i32_0 = arith.constant 0 : i32
    return %arg0, %arg1, %c0_i32 : i32, i32, i32
  }
  func.func @transform_1(%arg0: i32, %arg1: i32) -> i32 {
    %c0_i32 = arith.constant 0 : i32
    %c0_i32_0 = arith.constant 0 : i32
    return %c0_i32 : i32
  }
  func.func @transform_2(%arg0: i32, %arg1: i32) -> (i32, i32) {
    %c0_i32 = arith.constant 0 : i32
    %c0_i32_0 = arith.constant 0 : i32
    return %arg0, %c0_i32 : i32, i32
  }
}

</mosaic_0001>

<llo_original>
// kernel: tpu_custom_call.1
$region0: #{tpu_custom_call.1}
  #allocation0 [shape = 'u32[]', space=smem, size = 0x4, offset = 0x4, fixed_abs, tag = 'smem constant byte address 0x4 - core index']
  #allocation1 [shape = 'u32[72,128]{1,0:T(1,128)}', space=vmem, size = 0x9000, scoped, tag = 'internal scratch']
  #allocation2 [shape = 'f32[2,2,512]{2,1,0:T(2,128)}', space=vmem, size = 0x2000, scoped, tag = 'scratch operand']
  %s0 = inlined_call_operand.hbm [shape: f32[2,4,256], index: 0, kind: input, shape index: {}]
  %s1 = inlined_call_operand.hbm [shape: f32[98], index: 1, kind: input, shape index: {}]
  %s2 = inlined_call_operand.hbm [shape: f32[2,256], index: 2, kind: output, shape index: {}]
  %s3 = sld [smem:[#allocation0]]
  $region26: #{tpu_custom_call.1} parent=0
    _
  %s5 = ssub.s32 1, %s3
  %s6 = scalar_select 0, %s5, %s3
  $region1: #{tpu_custom_call.1} parent=0
    #allocation3 [shape = 'u8[8192]{0}', space=vmem, size = 0x2000, scoped, tag = 'input window, operand 0, single buffered']
    #allocation4 [shape = 's32[1]{0}', space=sflag, size = 0x4, scoped, tag = 'scoped memory for tpu_custom_call.1']
    #allocation5 [shape = 's32[1]{0}', space=sflag, size = 0x4, scoped, tag = 'scoped memory for tpu_custom_call.1']
    #allocation6 [shape = 's32[1]{0}', space=sflag, size = 0x4, scoped, tag = 'scoped memory for tpu_custom_call.1']
    #allocation7 [shape = 'u8[512]{0}', space=smem, size = 0x200, scoped, tag = 'input window, operand 1, single buffered']
    #allocation8 [shape = 'u8[2048]{0}', space=vmem, size = 0x800, scoped, tag = 'output window, operand 0, single buffered']
    %7 = vsyncpa [#allocation4], 0
    %8 = vsyncpa [#allocation6], 0
    %9 = vsyncpa [#allocation5], 0
    // Predicated region
    $region2: #{tpu_custom_call.1} parent=1 // pred_check
      _
    $region3: #{tpu_custom_call.1} parent=1 // pred_check_branch
      %11 = sbr.rel (0) target = $region5
    $region4: #{tpu_custom_call.1} parent=1 // pred_region
      %13 = vsyncadd [#allocation4], 0
      %s14 = sshll.u32 %s0, 4
      %s15 = int_to_ptr.hbm [resolvable:$true] %s14
      %s16 = sshll.u32 [#allocation3], 4
      %s17 = int_to_ptr.vmem [resolvable:$true] %s16
      %22 = dma.hbm_to_vmem [thread:$0]  %s15, 256, %s17, [#allocation4], 128, 128, 8
    $region5: #{tpu_custom_call.1} parent=1 // pred_fallthru
      _
    // Predicated region
    $region6: #{tpu_custom_call.1} parent=1 // pred_check
      _
    $region7: #{tpu_custom_call.1} parent=1 // pred_check_branch
      %24 = sbr.rel (0) target = $region9
    $region8: #{tpu_custom_call.1} parent=1 // pred_region
      %26 = vsyncadd [#allocation6], 0
      %s28 = sshll.u32 %s1, 4
      %s29 = int_to_ptr.hbm [resolvable:$true] %s28
      %31 = dma.hbm_to_smem %s29, 16, [#allocation7], [#allocation6]
    $region9: #{tpu_custom_call.1} parent=1 // pred_fallthru
      _
    // Predicated region
    $region10: #{tpu_custom_call.1} parent=1 // pred_check
      _
    $region11: #{tpu_custom_call.1} parent=1 // pred_check_branch
      %33 = sbr.rel (0) target = $region13
    $region12: #{tpu_custom_call.1} parent=1 // pred_region
      %35 = dma.done [#allocation4], 256
    $region13: #{tpu_custom_call.1} parent=1 // pred_fallthru
      _
    // Predicated region
    $region14: #{tpu_custom_call.1} parent=1 // pred_check
      _
    $region15: #{tpu_custom_call.1} parent=1 // pred_check_branch
      %37 = sbr.rel (0) target = $region17
    $region16: #{tpu_custom_call.1} parent=1 // pred_region
      %39 = dma.done [#allocation6], 16
    $region17: #{tpu_custom_call.1} parent=1 // pred_fallthru
      _
    %40 = sfence
    %v41 = vld [vmem:[#allocation3] sm:$0xff]
    %v42 = vld [vmem:[#allocation3 + $0x8] sm:$0xff]
    %45 = vst [vmem:[#allocation1] ss:$2 sm:$0xff] %v41
    %v46 = vld.sshfl [vmem:[#allocation1] sm:$0xff pattern:$0x75316420]
    %v47 = vld.sshfl [vmem:[#allocation1 + $0x8] sm:$0xff pattern:$0x75316420]
    %s48 = scalar_lea.vmem [#allocation1], 16
    %49 = vst [vmem:[%s48] ss:$2 sm:$0xff] %v42
    %v50 = vld.sshfl [vmem:[#allocation1 + $0x10] sm:$0xff pattern:$0x75316420]
    %v51 = vld.sshfl [vmem:[#allocation1 + $0x18] sm:$0xff pattern:$0x75316420]
    %vm56 = vcmask 1043456
    %v57 = vsel %vm56, %v46, 0.0
    %v58 = vrot.slane %v57, 4
    %v59 = vadd.f32 %v57, %v58
    %v60 = vrot.slane %v59, 2
    %v61 = vadd.f32 %v59, %v60
    %v62 = vrot.slane %v61, 1
    %v63 = vadd.f32 %v61, %v62
    %v64 = vsel %vm56, %v47, 0.0
    %v65 = vrot.slane %v64, 4
    %v66 = vadd.f32 %v64, %v65
    %v67 = vrot.slane %v66, 2
    %v68 = vadd.f32 %v66, %v67
    %v69 = vrot.slane %v68, 1
    %v70 = vadd.f32 %v68, %v69
    %v71 = vsel %vm56, %v50, 0.0
    %v72 = vrot.slane %v71, 4
    %v73 = vadd.f32 %v71, %v72
    %v74 = vrot.slane %v73, 2
    %v75 = vadd.f32 %v73, %v74
    %v76 = vrot.slane %v75, 1
    %v77 = vadd.f32 %v75, %v76
    %v78 = vsel %vm56, %v51, 0.0
    %v79 = vrot.slane %v78, 4
    %v80 = vadd.f32 %v78, %v79
    %v81 = vrot.slane %v80, 2
    %v82 = vadd.f32 %v80, %v81
    %v83 = vrot.slane %v82, 1
    %v84 = vadd.f32 %v82, %v83
    %v85 = vrcp.pop 4.0
    %v86 = vmul.f32 4.0, %v85
    %v87 = vsub.f32 1.0, %v86
    %v88 = vmul.f32 %v85, %v87
    %v89 = vadd.f32 %v85, %v88
    %vm90 = vweird.f32 %v85
    %v91 = vsel %vm90, %v85, %v89
    %v92 = vmul.f32 %v63, %v91
    %v93 = vmul.f32 %v70, %v91
    %v94 = vmul.f32 %v77, %v91
    %v95 = vmul.f32 %v84, %v91
    %96 = vst [vmem:[#allocation1] ss:$2 sm:$0xff] %v41
    %v97 = vld.sshfl [vmem:[#allocation1] sm:$0xff pattern:$0x75316420]
    %v98 = vld.sshfl [vmem:[#allocation1 + $0x8] sm:$0xff pattern:$0x75316420]
    %s99 = scalar_lea.vmem [#allocation1], 16
    %100 = vst [vmem:[%s99] ss:$2 sm:$0xff] %v42
    %v101 = vld.sshfl [vmem:[#allocation1 + $0x10] sm:$0xff pattern:$0x75316420]
    %v102 = vld.sshfl [vmem:[#allocation1 + $0x18] sm:$0xff pattern:$0x75316420]
    %v107 = vsel %vm56, %v97, -inf
    %v108 = vrot.slane %v107, 4
    %v109 = vmax.f32 %v107, %v108
    %v110 = vrot.slane %v109, 2
    %v111 = vmax.f32 %v109, %v110
    %v112 = vrot.slane %v111, 1
    %v113 = vmax.f32 %v111, %v112
    %v114 = vsel %vm56, %v98, -inf
    %v115 = vrot.slane %v114, 4
    %v116 = vmax.f32 %v114, %v115
    %v117 = vrot.slane %v116, 2
    %v118 = vmax.f32 %v116, %v117
    %v119 = vrot.slane %v118, 1
    %v120 = vmax.f32 %v118, %v119
    %v121 = vsel %vm56, %v101, -inf
    %v122 = vrot.slane %v121, 4
    %v123 = vmax.f32 %v121, %v122
    %v124 = vrot.slane %v123, 2
    %v125 = vmax.f32 %v123, %v124
    %v126 = vrot.slane %v125, 1
    %v127 = vmax.f32 %v125, %v126
    %v128 = vsel %vm56, %v102, -inf
    %v129 = vrot.slane %v128, 4
    %v130 = vmax.f32 %v128, %v129
    %v131 = vrot.slane %v130, 2
    %v132 = vmax.f32 %v130, %v131
    %v133 = vrot.slane %v132, 1
    %v134 = vmax.f32 %v132, %v133
    %135 = vst [vmem:[#allocation2] sm:$0x3] 0.0
    %136 = vst [vmem:[#allocation2 + $0x6] sm:$0x3] 0.0
    %s137 = scalar_lea.vmem [#allocation2], 8
    %138 = vst [vmem:[%s137] sm:$0x3] 0.0
    %139 = vst [vmem:[%s137 + $0x6] sm:$0x3] 0.0
    %v144 = vrot.slane %v93, 6
    %v145 = vrot.slane %v95, 6
    %vm146 = vcmask 1041408
    %v147 = vsel %vm146, %v92, %v144
    %v148 = vsel %vm146, %v94, %v145
    %vm149 = vcmask 1044484
    %v150 = vsel %vm149, %v147, %v147
    %vm151 = vcmask 1046534
    %v152 = vsel %vm151, %v147, %v150
    %v153 = vrot.slane %v148, 7
    %vm154 = vcmask 1041409
    %v155 = vsel %vm154, %v153, %v152
    %vm156 = vcmask 1043459
    %v157 = vsel %vm156, %v153, %v155
    %vm158 = vcmask 1045509
    %v159 = vsel %vm158, %v153, %v157
    %vm160 = vcmask 1047559
    %v161 = vsel %vm160, %v153, %v159
    %163 = vst [vmem:[#allocation2 + $0x2] sm:$0xf] %v161
    %v168 = vrot.slane %v120, 6
    %v169 = vrot.slane %v134, 6
    %v170 = vsel %vm146, %v113, %v168
    %v171 = vsel %vm146, %v127, %v169
    %v172 = vsel %vm149, %v170, %v170
    %v173 = vsel %vm151, %v170, %v172
    %v174 = vrot.slane %v171, 7
    %v175 = vsel %vm154, %v174, %v173
    %v176 = vsel %vm156, %v174, %v175
    %v177 = vsel %vm158, %v174, %v176
    %v178 = vsel %vm160, %v174, %v177
    %180 = vst [vmem:[%s137 + $0x2] sm:$0xf] %v178
    %v181 = vlaneseq
    %v182 = vand.u32 %v181, 127
    %v183 = vadd.s32 %v182, 128
    %v184 = vand.u32 %v182, 15
    %v185 = vand.u32 %v183, 15
    %v186 = vld [vmem:[#allocation2] sm:$0x3f]
    %s187 = sld [smem:[#allocation7]]
    %v188 = vstv %s187
    %v189 = vmul.f32 %v188, %v186
    %v190 = vadd.f32 %v189, 0.0
    %s191 = sld [smem:[#allocation7 + $0x1]]
    %v192 = vstv %s191
    %v193 = vmul.f32 %v192, %v186
    %v194 = vadd.f32 %v193, 0.0
    %s195 = sld [smem:[#allocation7 + $0x2]]
    %v196 = vstv %s195
    %v197 = vmul.f32 %v196, %v186
    %v198 = vadd.f32 %v197, 0.0
    %s199 = sld [smem:[#allocation7 + $0x3]]
    %v200 = vstv %s199
    %v201 = vmul.f32 %v200, %v186
    %v202 = vadd.f32 %v201, 0.0
    %s203 = sld [smem:[#allocation7 + $0x4]]
    %v204 = vstv %s203
    %v205 = vmul.f32 %v204, %v186
    %v206 = vadd.f32 %v205, 0.0
    %s207 = sld [smem:[#allocation7 + $0x5]]
    %v208 = vstv %s207
    %v209 = vmul.f32 %v208, %v186
    %v210 = vadd.f32 %v209, 0.0
    %s211 = sld [smem:[#allocation7 + $0x6]]
    %v212 = vstv %s211
    %v213 = vmul.f32 %v212, %v186
    %v214 = vadd.f32 %v213, 0.0
    %s215 = sld [smem:[#allocation7 + $0x7]]
    %v216 = vstv %s215
    %v217 = vmul.f32 %v216, %v186
    %219 = vrot.lane.b32.xlu0 %v217, 112
    %v220 = vpop.permute.xlu0 %219
    %v221 = vrot.slane %v220, 2
    %vm222 = vcmask 916480
    %v223 = vsel %vm222, %v220, %v221
    %v225 = vadd.f32 %v190, %v223
    %s226 = sld [smem:[#allocation7 + $0x8]]
    %v227 = vstv %s226
    %v228 = vmul.f32 %v227, %v186
    %230 = vrot.lane.b32.xlu0 %v228, 112
    %v231 = vpop.permute.xlu0 %230
    %v232 = vrot.slane %v231, 2
    %v233 = vsel %vm222, %v231, %v232
    %v235 = vadd.f32 %v194, %v233
    %s236 = sld [smem:[#allocation7 + $0x9]]
    %v237 = vstv %s236
    %v238 = vmul.f32 %v237, %v186
    %240 = vrot.lane.b32.xlu0 %v238, 112
    %v241 = vpop.permute.xlu0 %240
    %v242 = vrot.slane %v241, 2
    %v243 = vsel %vm222, %v241, %v242
    %v245 = vadd.f32 %v198, %v243
    %s246 = sld [smem:[#allocation7 + $0xa]]
    %v247 = vstv %s246
    %v248 = vmul.f32 %v247, %v186
    %250 = vrot.lane.b32.xlu0 %v248, 112
    %v251 = vpop.permute.xlu0 %250
    %v252 = vrot.slane %v251, 2
    %v253 = vsel %vm222, %v251, %v252
    %v255 = vadd.f32 %v202, %v253
    %s256 = sld [smem:[#allocation7 + $0xb]]
    %v257 = vstv %s256
    %v258 = vmul.f32 %v257, %v186
    %260 = vrot.lane.b32.xlu0 %v258, 112
    %v261 = vpop.permute.xlu0 %260
    %v262 = vrot.slane %v261, 2
    %v263 = vsel %vm222, %v261, %v262
    %v265 = vadd.f32 %v206, %v263
    %s266 = sld [smem:[#allocation7 + $0xc]]
    %v267 = vstv %s266
    %v268 = vmul.f32 %v267, %v186
    %270 = vrot.lane.b32.xlu0 %v268, 112
    %v271 = vpop.permute.xlu0 %270
    %v272 = vrot.slane %v271, 2
    %v273 = vsel %vm222, %v271, %v272
    %v275 = vadd.f32 %v210, %v273
    %s276 = sld [smem:[#allocation7 + $0xd]]
    %v277 = vstv %s276
    %v278 = vmul.f32 %v277, %v186
    %280 = vrot.lane.b32.xlu0 %v278, 112
    %v281 = vpop.permute.xlu0 %280
    %v282 = vrot.slane %v281, 2
    %v283 = vsel %vm222, %v281, %v282
    %v285 = vadd.f32 %v214, %v283
    %s286 = sld [smem:[#allocation7 + $0xe]]
    %v287 = vstv %s286
    %v288 = vmul.f32 %v287, %v186
    %290 = vrot.lane.b32.xlu0 %v288, 96
    %v291 = vpop.permute.xlu0 %290
    %v292 = vrot.slane %v291, 2
    %vm293 = vcmask 785408
    %v294 = vsel %vm293, %v291, %v292
    %v296 = vadd.f32 %v225, %v294
    %s297 = sld [smem:[#allocation7 + $0xf]]
    %v298 = vstv %s297
    %v299 = vmul.f32 %v298, %v186
    %301 = vrot.lane.b32.xlu0 %v299, 96
    %v302 = vpop.permute.xlu0 %301
    %v303 = vrot.slane %v302, 2
    %v304 = vsel %vm293, %v302, %v303
    %v306 = vadd.f32 %v235, %v304
    %s307 = sld [smem:[#allocation7 + $0x10]]
    %v308 = vstv %s307
    %v309 = vmul.f32 %v308, %v186
    %311 = vrot.lane.b32.xlu0 %v309, 96
    %v312 = vpop.permute.xlu0 %311
    %v313 = vrot.slane %v312, 2
    %v314 = vsel %vm293, %v312, %v313
    %v316 = vadd.f32 %v245, %v314
    %s317 = sld [smem:[#allocation7 + $0x11]]
    %v318 = vstv %s317
    %v319 = vmul.f32 %v318, %v186
    %321 = vrot.lane.b32.xlu0 %v319, 96
    %v322 = vpop.permute.xlu0 %321
    %v323 = vrot.slane %v322, 2
    %v324 = vsel %vm293, %v322, %v323
    %v326 = vadd.f32 %v255, %v324
    %s327 = sld [smem:[#allocation7 + $0x12]]
    %v328 = vstv %s327
    %v329 = vmul.f32 %v328, %v186
    %331 = vrot.lane.b32.xlu0 %v329, 96
    %v332 = vpop.permute.xlu0 %331
    %v333 = vrot.slane %v332, 2
    %v334 = vsel %vm293, %v332, %v333
    %v336 = vadd.f32 %v265, %v334
    %s337 = sld [smem:[#allocation7 + $0x13]]
    %v338 = vstv %s337
    %v339 = vmul.f32 %v338, %v186
    %341 = vrot.lane.b32.xlu0 %v339, 96
    %v342 = vpop.permute.xlu0 %341
    %v343 = vrot.slane %v342, 2
    %v344 = vsel %vm293, %v342, %v343
    %v346 = vadd.f32 %v275, %v344
    %s347 = sld [smem:[#allocation7 + $0x14]]
    %v348 = vstv %s347
    %v349 = vmul.f32 %v348, %v186
    %351 = vrot.lane.b32.xlu0 %v349, 96
    %v352 = vpop.permute.xlu0 %351
    %v353 = vrot.slane %v352, 2
    %v354 = vsel %vm293, %v352, %v353
    %v356 = vadd.f32 %v285, %v354
    %v357 = vld [vmem:[#allocation2 + $0x2] sm:$0xf]
    %s358 = sld [smem:[#allocation7 + $0x15]]
    %v359 = vstv %s358
    %v360 = vmul.f32 %v359, %v357
    %362 = vrot.lane.b32.xlu0 %v360, 80
    %v363 = vpop.permute.xlu0 %362
    %v364 = vrot.slane %v363, 6
    %vm365 = vcmask 654336
    %v366 = vsel %vm365, %v364, %v363
    %v368 = vadd.f32 %v296, %v366
    %s369 = sld [smem:[#allocation7 + $0x16]]
    %v370 = vstv %s369
    %v371 = vmul.f32 %v370, %v357
    %373 = vrot.lane.b32.xlu0 %v371, 80
    %v374 = vpop.permute.xlu0 %373
    %v375 = vrot.slane %v374, 6
    %v376 = vsel %vm365, %v375, %v374
    %v378 = vadd.f32 %v306, %v376
    %s379 = sld [smem:[#allocation7 + $0x17]]
    %v380 = vstv %s379
    %v381 = vmul.f32 %v380, %v357
    %383 = vrot.lane.b32.xlu0 %v381, 80
    %v384 = vpop.permute.xlu0 %383
    %v385 = vrot.slane %v384, 6
    %v386 = vsel %vm365, %v385, %v384
    %v388 = vadd.f32 %v316, %v386
    %s389 = sld [smem:[#allocation7 + $0x18]]
    %v390 = vstv %s389
    %v391 = vmul.f32 %v390, %v357
    %393 = vrot.lane.b32.xlu0 %v391, 80
    %v394 = vpop.permute.xlu0 %393
    %v395 = vrot.slane %v394, 6
    %v396 = vsel %vm365, %v395, %v394
    %v398 = vadd.f32 %v326, %v396
    %s399 = sld [smem:[#allocation7 + $0x19]]
    %v400 = vstv %s399
    %v401 = vmul.f32 %v400, %v357
    %403 = vrot.lane.b32.xlu0 %v401, 80
    %v404 = vpop.permute.xlu0 %403
    %v405 = vrot.slane %v404, 6
    %v406 = vsel %vm365, %v405, %v404
    %v408 = vadd.f32 %v336, %v406
    %s409 = sld [smem:[#allocation7 + $0x1a]]
    %v410 = vstv %s409
    %v411 = vmul.f32 %v410, %v357
    %413 = vrot.lane.b32.xlu0 %v411, 80
    %v414 = vpop.permute.xlu0 %413
    %v415 = vrot.slane %v414, 6
    %v416 = vsel %vm365, %v415, %v414
    %v418 = vadd.f32 %v346, %v416
    %s419 = sld [smem:[#allocation7 + $0x1b]]
    %v420 = vstv %s419
    %v421 = vmul.f32 %v420, %v357
    %423 = vrot.lane.b32.xlu0 %v421, 80
    %v424 = vpop.permute.xlu0 %423
    %v425 = vrot.slane %v424, 6
    %v426 = vsel %vm365, %v425, %v424
    %v428 = vadd.f32 %v356, %v426
    %v429 = vld [vmem:[#allocation2 + $0x2] sm:$0x3f]
    %s430 = sld [smem:[#allocation7 + $0x1c]]
    %v431 = vstv %s430
    %v432 = vmul.f32 %v431, %v429
    %434 = vrot.lane.b32.xlu0 %v432, 64
    %v435 = vpop.permute.xlu0 %434
    %v436 = vrot.slane %v435, 6
    %vm437 = vcmask 523264
    %v438 = vsel %vm437, %v436, %v435
    %v440 = vadd.f32 %v368, %v438
    %s441 = sld [smem:[#allocation7 + $0x1d]]
    %v442 = vstv %s441
    %v443 = vmul.f32 %v442, %v429
    %445 = vrot.lane.b32.xlu0 %v443, 64
    %v446 = vpop.permute.xlu0 %445
    %v447 = vrot.slane %v446, 6
    %v448 = vsel %vm437, %v447, %v446
    %v450 = vadd.f32 %v378, %v448
    %s451 = sld [smem:[#allocation7 + $0x1e]]
    %v452 = vstv %s451
    %v453 = vmul.f32 %v452, %v429
    %455 = vrot.lane.b32.xlu0 %v453, 64
    %v456 = vpop.permute.xlu0 %455
    %v457 = vrot.slane %v456, 6
    %v458 = vsel %vm437, %v457, %v456
    %v460 = vadd.f32 %v388, %v458
    %s461 = sld [smem:[#allocation7 + $0x1f]]
    %v462 = vstv %s461
    %v463 = vmul.f32 %v462, %v429
    %465 = vrot.lane.b32.xlu0 %v463, 64
    %v466 = vpop.permute.xlu0 %465
    %v467 = vrot.slane %v466, 6
    %v468 = vsel %vm437, %v467, %v466
    %v470 = vadd.f32 %v398, %v468
    %s471 = sld [smem:[#allocation7 + $0x20]]
    %v472 = vstv %s471
    %v473 = vmul.f32 %v472, %v429
    %475 = vrot.lane.b32.xlu0 %v473, 64
    %v476 = vpop.permute.xlu0 %475
    %v477 = vrot.slane %v476, 6
    %v478 = vsel %vm437, %v477, %v476
    %v480 = vadd.f32 %v408, %v478
    %s481 = sld [smem:[#allocation7 + $0x21]]
    %v482 = vstv %s481
    %v483 = vmul.f32 %v482, %v429
    %485 = vrot.lane.b32.xlu0 %v483, 64
    %v486 = vpop.permute.xlu0 %485
    %v487 = vrot.slane %v486, 6
    %v488 = vsel %vm437, %v487, %v486
    %v490 = vadd.f32 %v418, %v488
    %s491 = sld [smem:[#allocation7 + $0x22]]
    %v492 = vstv %s491
    %v493 = vmul.f32 %v492, %v429
    %495 = vrot.lane.b32.xlu0 %v493, 64
    %v496 = vpop.permute.xlu0 %495
    %v497 = vrot.slane %v496, 6
    %v498 = vsel %vm437, %v497, %v496
    %v500 = vadd.f32 %v428, %v498
    %s501 = sld [smem:[#allocation7 + $0x23]]
    %v502 = vstv %s501
    %v503 = vmul.f32 %v502, %v429
    %505 = vrot.lane.b32.xlu0 %v503, 48
    %v506 = vpop.permute.xlu0 %505
    %v507 = vrot.slane %v506, 6
    %vm508 = vcmask 392192
    %v509 = vsel %vm508, %v507, %v506
    %v511 = vadd.f32 %v440, %v509
    %s512 = sld [smem:[#allocation7 + $0x24]]
    %v513 = vstv %s512
    %v514 = vmul.f32 %v513, %v429
    %516 = vrot.lane.b32.xlu0 %v514, 48
    %v517 = vpop.permute.xlu0 %516
    %v518 = vrot.slane %v517, 6
    %v519 = vsel %vm508, %v518, %v517
    %v521 = vadd.f32 %v450, %v519
    %s522 = sld [smem:[#allocation7 + $0x25]]
    %v523 = vstv %s522
    %v524 = vmul.f32 %v523, %v429
    %526 = vrot.lane.b32.xlu0 %v524, 48
    %v527 = vpop.permute.xlu0 %526
    %v528 = vrot.slane %v527, 6
    %v529 = vsel %vm508, %v528, %v527
    %v531 = vadd.f32 %v460, %v529
    %s532 = sld [smem:[#allocation7 + $0x26]]
    %v533 = vstv %s532
    %v534 = vmul.f32 %v533, %v429
    %536 = vrot.lane.b32.xlu0 %v534, 48
    %v537 = vpop.permute.xlu0 %536
    %v538 = vrot.slane %v537, 6
    %v539 = vsel %vm508, %v538, %v537
    %v541 = vadd.f32 %v470, %v539
    %s542 = sld [smem:[#allocation7 + $0x27]]
    %v543 = vstv %s542
    %v544 = vmul.f32 %v543, %v429
    %546 = vrot.lane.b32.xlu0 %v544, 48
    %v547 = vpop.permute.xlu0 %546
    %v548 = vrot.slane %v547, 6
    %v549 = vsel %vm508, %v548, %v547
    %v551 = vadd.f32 %v480, %v549
    %s552 = sld [smem:[#allocation7 + $0x28]]
    %v553 = vstv %s552
    %v554 = vmul.f32 %v553, %v429
    %556 = vrot.lane.b32.xlu0 %v554, 48
    %v557 = vpop.permute.xlu0 %556
    %v558 = vrot.slane %v557, 6
    %v559 = vsel %vm508, %v558, %v557
    %v561 = vadd.f32 %v490, %v559
    %s562 = sld [smem:[#allocation7 + $0x29]]
    %v563 = vstv %s562
    %v564 = vmul.f32 %v563, %v429
    %566 = vrot.lane.b32.xlu0 %v564, 48
    %v567 = vpop.permute.xlu0 %566
    %v568 = vrot.slane %v567, 6
    %v569 = vsel %vm508, %v568, %v567
    %v571 = vadd.f32 %v500, %v569
    %s572 = sld [smem:[#allocation7 + $0x2a]]
    %v573 = vstv %s572
    %v574 = vmul.f32 %v573, %v429
    %576 = vrot.lane.b32.xlu0 %v574, 32
    %v577 = vpop.permute.xlu0 %576
    %v578 = vrot.slane %v577, 6
    %vm579 = vcmask 261120
    %v580 = vsel %vm579, %v578, %v577
    %v582 = vadd.f32 %v511, %v580
    %s583 = sld [smem:[#allocation7 + $0x2b]]
    %v584 = vstv %s583
    %v585 = vmul.f32 %v584, %v429
    %587 = vrot.lane.b32.xlu0 %v585, 32
    %v588 = vpop.permute.xlu0 %587
    %v589 = vrot.slane %v588, 6
    %v590 = vsel %vm579, %v589, %v588
    %v592 = vadd.f32 %v521, %v590
    %s593 = sld [smem:[#allocation7 + $0x2c]]
    %v594 = vstv %s593
    %v595 = vmul.f32 %v594, %v429
    %597 = vrot.lane.b32.xlu0 %v595, 32
    %v598 = vpop.permute.xlu0 %597
    %v599 = vrot.slane %v598, 6
    %v600 = vsel %vm579, %v599, %v598
    %v602 = vadd.f32 %v531, %v600
    %s603 = sld [smem:[#allocation7 + $0x2d]]
    %v604 = vstv %s603
    %v605 = vmul.f32 %v604, %v429
    %607 = vrot.lane.b32.xlu0 %v605, 32
    %v608 = vpop.permute.xlu0 %607
    %v609 = vrot.slane %v608, 6
    %v610 = vsel %vm579, %v609, %v608
    %v612 = vadd.f32 %v541, %v610
    %s613 = sld [smem:[#allocation7 + $0x2e]]
    %v614 = vstv %s613
    %v615 = vmul.f32 %v614, %v429
    %617 = vrot.lane.b32.xlu0 %v615, 32
    %v618 = vpop.permute.xlu0 %617
    %v619 = vrot.slane %v618, 6
    %v620 = vsel %vm579, %v619, %v618
    %v622 = vadd.f32 %v551, %v620
    %s623 = sld [smem:[#allocation7 + $0x2f]]
    %v624 = vstv %s623
    %v625 = vmul.f32 %v624, %v429
    %627 = vrot.lane.b32.xlu0 %v625, 32
    %v628 = vpop.permute.xlu0 %627
    %v629 = vrot.slane %v628, 6
    %v630 = vsel %vm579, %v629, %v628
    %v632 = vadd.f32 %v561, %v630
    %s633 = sld [smem:[#allocation7 + $0x30]]
    %v634 = vstv %s633
    %v635 = vmul.f32 %v634, %v429
    %637 = vrot.lane.b32.xlu0 %v635, 32
    %v638 = vpop.permute.xlu0 %637
    %v639 = vrot.slane %v638, 6
    %v640 = vsel %vm579, %v639, %v638
    %v642 = vadd.f32 %v571, %v640
    %v643 = vld [vmem:[%s137] sm:$0x3f]
    %s644 = sld [smem:[#allocation7 + $0x31]]
    %v645 = vstv %s644
    %v646 = vmul.f32 %v645, %v643
    %v647 = vadd.f32 %v582, %v646
    %s648 = sld [smem:[#allocation7 + $0x32]]
    %v649 = vstv %s648
    %v650 = vmul.f32 %v649, %v643
    %v651 = vadd.f32 %v592, %v650
    %s652 = sld [smem:[#allocation7 + $0x33]]
    %v653 = vstv %s652
    %v654 = vmul.f32 %v653, %v643
    %v655 = vadd.f32 %v602, %v654
    %s656 = sld [smem:[#allocation7 + $0x34]]
    %v657 = vstv %s656
    %v658 = vmul.f32 %v657, %v643
    %v659 = vadd.f32 %v612, %v658
    %s660 = sld [smem:[#allocation7 + $0x35]]
    %v661 = vstv %s660
    %v662 = vmul.f32 %v661, %v643
    %v663 = vadd.f32 %v622, %v662
    %s664 = sld [smem:[#allocation7 + $0x36]]
    %v665 = vstv %s664
    %v666 = vmul.f32 %v665, %v643
    %v667 = vadd.f32 %v632, %v666
    %s668 = sld [smem:[#allocation7 + $0x37]]
    %v669 = vstv %s668
    %v670 = vmul.f32 %v669, %v643
    %v671 = vadd.f32 %v642, %v670
    %s672 = sld [smem:[#allocation7 + $0x38]]
    %v673 = vstv %s672
    %v674 = vmul.f32 %v673, %v643
    %676 = vrot.lane.b32.xlu0 %v674, 112
    %v677 = vpop.permute.xlu0 %676
    %v678 = vrot.slane %v677, 2
    %v679 = vsel %vm222, %v677, %v678
    %v681 = vadd.f32 %v647, %v679
    %s682 = sld [smem:[#allocation7 + $0x39]]
    %v683 = vstv %s682
    %v684 = vmul.f32 %v683, %v643
    %686 = vrot.lane.b32.xlu0 %v684, 112
    %v687 = vpop.permute.xlu0 %686
    %v688 = vrot.slane %v687, 2
    %v689 = vsel %vm222, %v687, %v688
    %v691 = vadd.f32 %v651, %v689
    %s692 = sld [smem:[#allocation7 + $0x3a]]
    %v693 = vstv %s692
    %v694 = vmul.f32 %v693, %v643
    %696 = vrot.lane.b32.xlu0 %v694, 112
    %v697 = vpop.permute.xlu0 %696
    %v698 = vrot.slane %v697, 2
    %v699 = vsel %vm222, %v697, %v698
    %v701 = vadd.f32 %v655, %v699
    %s702 = sld [smem:[#allocation7 + $0x3b]]
    %v703 = vstv %s702
    %v704 = vmul.f32 %v703, %v643
    %706 = vrot.lane.b32.xlu0 %v704, 112
    %v707 = vpop.permute.xlu0 %706
    %v708 = vrot.slane %v707, 2
    %v709 = vsel %vm222, %v707, %v708
    %v711 = vadd.f32 %v659, %v709
    %s712 = sld [smem:[#allocation7 + $0x3c]]
    %v713 = vstv %s712
    %v714 = vmul.f32 %v713, %v643
    %716 = vrot.lane.b32.xlu0 %v714, 112
    %v717 = vpop.permute.xlu0 %716
    %v718 = vrot.slane %v717, 2
    %v719 = vsel %vm222, %v717, %v718
    %v721 = vadd.f32 %v663, %v719
    %s722 = sld [smem:[#allocation7 + $0x3d]]
    %v723 = vstv %s722
    %v724 = vmul.f32 %v723, %v643
    %726 = vrot.lane.b32.xlu0 %v724, 112
    %v727 = vpop.permute.xlu0 %726
    %v728 = vrot.slane %v727, 2
    %v729 = vsel %vm222, %v727, %v728
    %v731 = vadd.f32 %v667, %v729
    %s732 = sld [smem:[#allocation7 + $0x3e]]
    %v733 = vstv %s732
    %v734 = vmul.f32 %v733, %v643
    %736 = vrot.lane.b32.xlu0 %v734, 112
    %v737 = vpop.permute.xlu0 %736
    %v738 = vrot.slane %v737, 2
    %v739 = vsel %vm222, %v737, %v738
    %v741 = vadd.f32 %v671, %v739
    %s742 = sld [smem:[#allocation7 + $0x3f]]
    %v743 = vstv %s742
    %v744 = vmul.f32 %v743, %v643
    %746 = vrot.lane.b32.xlu0 %v744, 96
    %v747 = vpop.permute.xlu0 %746
    %v748 = vrot.slane %v747, 2
    %v749 = vsel %vm293, %v747, %v748
    %v751 = vadd.f32 %v681, %v749
    %s752 = sld [smem:[#allocation7 + $0x40]]
    %v753 = vstv %s752
    %v754 = vmul.f32 %v753, %v643
    %756 = vrot.lane.b32.xlu0 %v754, 96
    %v757 = vpop.permute.xlu0 %756
    %v758 = vrot.slane %v757, 2
    %v759 = vsel %vm293, %v757, %v758
    %v761 = vadd.f32 %v691, %v759
    %s762 = sld [smem:[#allocation7 + $0x41]]
    %v763 = vstv %s762
    %v764 = vmul.f32 %v763, %v643
    %766 = vrot.lane.b32.xlu0 %v764, 96
    %v767 = vpop.permute.xlu0 %766
    %v768 = vrot.slane %v767, 2
    %v769 = vsel %vm293, %v767, %v768
    %v771 = vadd.f32 %v701, %v769
    %s772 = sld [smem:[#allocation7 + $0x42]]
    %v773 = vstv %s772
    %v774 = vmul.f32 %v773, %v643
    %776 = vrot.lane.b32.xlu0 %v774, 96
    %v777 = vpop.permute.xlu0 %776
    %v778 = vrot.slane %v777, 2
    %v779 = vsel %vm293, %v777, %v778
    %v781 = vadd.f32 %v711, %v779
    %s782 = sld [smem:[#allocation7 + $0x43]]
    %v783 = vstv %s782
    %v784 = vmul.f32 %v783, %v643
    %786 = vrot.lane.b32.xlu0 %v784, 96
    %v787 = vpop.permute.xlu0 %786
    %v788 = vrot.slane %v787, 2
    %v789 = vsel %vm293, %v787, %v788
    %v791 = vadd.f32 %v721, %v789
    %s792 = sld [smem:[#allocation7 + $0x44]]
    %v793 = vstv %s792
    %v794 = vmul.f32 %v793, %v643
    %796 = vrot.lane.b32.xlu0 %v794, 96
    %v797 = vpop.permute.xlu0 %796
    %v798 = vrot.slane %v797, 2
    %v799 = vsel %vm293, %v797, %v798
    %v801 = vadd.f32 %v731, %v799
    %s802 = sld [smem:[#allocation7 + $0x45]]
    %v803 = vstv %s802
    %v804 = vmul.f32 %v803, %v643
    %806 = vrot.lane.b32.xlu0 %v804, 96
    %v807 = vpop.permute.xlu0 %806
    %v808 = vrot.slane %v807, 2
    %v809 = vsel %vm293, %v807, %v808
    %v811 = vadd.f32 %v741, %v809
    %v812 = vld [vmem:[%s137 + $0x2] sm:$0xf]
    %s813 = sld [smem:[#allocation7 + $0x46]]
    %v814 = vstv %s813
    %v815 = vmul.f32 %v814, %v812
    %817 = vrot.lane.b32.xlu0 %v815, 80
    %v818 = vpop.permute.xlu0 %817
    %v819 = vrot.slane %v818, 6
    %v820 = vsel %vm365, %v819, %v818
    %v822 = vadd.f32 %v751, %v820
    %s823 = sld [smem:[#allocation7 + $0x47]]
    %v824 = vstv %s823
    %v825 = vmul.f32 %v824, %v812
    %827 = vrot.lane.b32.xlu0 %v825, 80
    %v828 = vpop.permute.xlu0 %827
    %v829 = vrot.slane %v828, 6
    %v830 = vsel %vm365, %v829, %v828
    %v832 = vadd.f32 %v761, %v830
    %s833 = sld [smem:[#allocation7 + $0x48]]
    %v834 = vstv %s833
    %v835 = vmul.f32 %v834, %v812
    %837 = vrot.lane.b32.xlu0 %v835, 80
    %v838 = vpop.permute.xlu0 %837
    %v839 = vrot.slane %v838, 6
    %v840 = vsel %vm365, %v839, %v838
    %v842 = vadd.f32 %v771, %v840
    %s843 = sld [smem:[#allocation7 + $0x49]]
    %v844 = vstv %s843
    %v845 = vmul.f32 %v844, %v812
    %847 = vrot.lane.b32.xlu0 %v845, 80
    %v848 = vpop.permute.xlu0 %847
    %v849 = vrot.slane %v848, 6
    %v850 = vsel %vm365, %v849, %v848
    %v852 = vadd.f32 %v781, %v850
    %s853 = sld [smem:[#allocation7 + $0x4a]]
    %v854 = vstv %s853
    %v855 = vmul.f32 %v854, %v812
    %857 = vrot.lane.b32.xlu0 %v855, 80
    %v858 = vpop.permute.xlu0 %857
    %v859 = vrot.slane %v858, 6
    %v860 = vsel %vm365, %v859, %v858
    %v862 = vadd.f32 %v791, %v860
    %s863 = sld [smem:[#allocation7 + $0x4b]]
    %v864 = vstv %s863
    %v865 = vmul.f32 %v864, %v812
    %867 = vrot.lane.b32.xlu0 %v865, 80
    %v868 = vpop.permute.xlu0 %867
    %v869 = vrot.slane %v868, 6
    %v870 = vsel %vm365, %v869, %v868
    %v872 = vadd.f32 %v801, %v870
    %s873 = sld [smem:[#allocation7 + $0x4c]]
    %v874 = vstv %s873
    %v875 = vmul.f32 %v874, %v812
    %877 = vrot.lane.b32.xlu0 %v875, 80
    %v878 = vpop.permute.xlu0 %877
    %v879 = vrot.slane %v878, 6
    %v880 = vsel %vm365, %v879, %v878
    %v882 = vadd.f32 %v811, %v880
    %v883 = vld [vmem:[%s137 + $0x2] sm:$0x3f]
    %s884 = sld [smem:[#allocation7 + $0x4d]]
    %v885 = vstv %s884
    %v886 = vmul.f32 %v885, %v883
    %888 = vrot.lane.b32.xlu0 %v886, 64
    %v889 = vpop.permute.xlu0 %888
    %v890 = vrot.slane %v889, 6
    %v891 = vsel %vm437, %v890, %v889
    %v893 = vadd.f32 %v822, %v891
    %s894 = sld [smem:[#allocation7 + $0x4e]]
    %v895 = vstv %s894
    %v896 = vmul.f32 %v895, %v883
    %898 = vrot.lane.b32.xlu0 %v896, 64
    %v899 = vpop.permute.xlu0 %898
    %v900 = vrot.slane %v899, 6
    %v901 = vsel %vm437, %v900, %v899
    %v903 = vadd.f32 %v832, %v901
    %s904 = sld [smem:[#allocation7 + $0x4f]]
    %v905 = vstv %s904
    %v906 = vmul.f32 %v905, %v883
    %908 = vrot.lane.b32.xlu0 %v906, 64
    %v909 = vpop.permute.xlu0 %908
    %v910 = vrot.slane %v909, 6
    %v911 = vsel %vm437, %v910, %v909
    %v913 = vadd.f32 %v842, %v911
    %s914 = sld [smem:[#allocation7 + $0x50]]
    %v915 = vstv %s914
    %v916 = vmul.f32 %v915, %v883
    %918 = vrot.lane.b32.xlu0 %v916, 64
    %v919 = vpop.permute.xlu0 %918
    %v920 = vrot.slane %v919, 6
    %v921 = vsel %vm437, %v920, %v919
    %v923 = vadd.f32 %v852, %v921
    %s924 = sld [smem:[#allocation7 + $0x51]]
    %v925 = vstv %s924
    %v926 = vmul.f32 %v925, %v883
    %928 = vrot.lane.b32.xlu0 %v926, 64
    %v929 = vpop.permute.xlu0 %928
    %v930 = vrot.slane %v929, 6
    %v931 = vsel %vm437, %v930, %v929
    %v933 = vadd.f32 %v862, %v931
    %s934 = sld [smem:[#allocation7 + $0x52]]
    %v935 = vstv %s934
    %v936 = vmul.f32 %v935, %v883
    %938 = vrot.lane.b32.xlu0 %v936, 64
    %v939 = vpop.permute.xlu0 %938
    %v940 = vrot.slane %v939, 6
    %v941 = vsel %vm437, %v940, %v939
    %v943 = vadd.f32 %v872, %v941
    %s944 = sld [smem:[#allocation7 + $0x53]]
    %v945 = vstv %s944
    %v946 = vmul.f32 %v945, %v883
    %948 = vrot.lane.b32.xlu0 %v946, 64
    %v949 = vpop.permute.xlu0 %948
    %v950 = vrot.slane %v949, 6
    %v951 = vsel %vm437, %v950, %v949
    %v953 = vadd.f32 %v882, %v951
    %s954 = sld [smem:[#allocation7 + $0x54]]
    %v955 = vstv %s954
    %v956 = vmul.f32 %v955, %v883
    %958 = vrot.lane.b32.xlu0 %v956, 48
    %v959 = vpop.permute.xlu0 %958
    %v960 = vrot.slane %v959, 6
    %v961 = vsel %vm508, %v960, %v959
    %v963 = vadd.f32 %v893, %v961
    %s964 = sld [smem:[#allocation7 + $0x55]]
    %v965 = vstv %s964
    %v966 = vmul.f32 %v965, %v883
    %968 = vrot.lane.b32.xlu0 %v966, 48
    %v969 = vpop.permute.xlu0 %968
    %v970 = vrot.slane %v969, 6
    %v971 = vsel %vm508, %v970, %v969
    %v973 = vadd.f32 %v903, %v971
    %s974 = sld [smem:[#allocation7 + $0x56]]
    %v975 = vstv %s974
    %v976 = vmul.f32 %v975, %v883
    %978 = vrot.lane.b32.xlu0 %v976, 48
    %v979 = vpop.permute.xlu0 %978
    %v980 = vrot.slane %v979, 6
    %v981 = vsel %vm508, %v980, %v979
    %v983 = vadd.f32 %v913, %v981
    %s984 = sld [smem:[#allocation7 + $0x57]]
    %v985 = vstv %s984
    %v986 = vmul.f32 %v985, %v883
    %988 = vrot.lane.b32.xlu0 %v986, 48
    %v989 = vpop.permute.xlu0 %988
    %v990 = vrot.slane %v989, 6
    %v991 = vsel %vm508, %v990, %v989
    %v993 = vadd.f32 %v923, %v991
    %s994 = sld [smem:[#allocation7 + $0x58]]
    %v995 = vstv %s994
    %v996 = vmul.f32 %v995, %v883
    %998 = vrot.lane.b32.xlu0 %v996, 48
    %v999 = vpop.permute.xlu0 %998
    %v1000 = vrot.slane %v999, 6
    %v1001 = vsel %vm508, %v1000, %v999
    %v1003 = vadd.f32 %v933, %v1001
    %s1004 = sld [smem:[#allocation7 + $0x59]]
    %v1005 = vstv %s1004
    %v1006 = vmul.f32 %v1005, %v883
    %1008 = vrot.lane.b32.xlu0 %v1006, 48
    %v1009 = vpop.permute.xlu0 %1008
    %v1010 = vrot.slane %v1009, 6
    %v1011 = vsel %vm508, %v1010, %v1009
    %v1013 = vadd.f32 %v943, %v1011
    %s1014 = sld [smem:[#allocation7 + $0x5a]]
    %v1015 = vstv %s1014
    %v1016 = vmul.f32 %v1015, %v883
    %1018 = vrot.lane.b32.xlu0 %v1016, 48
    %v1019 = vpop.permute.xlu0 %1018
    %v1020 = vrot.slane %v1019, 6
    %v1021 = vsel %vm508, %v1020, %v1019
    %v1023 = vadd.f32 %v953, %v1021
    %s1024 = sld [smem:[#allocation7 + $0x5b]]
    %v1025 = vstv %s1024
    %v1026 = vmul.f32 %v1025, %v883
    %1028 = vrot.lane.b32.xlu0 %v1026, 32
    %v1029 = vpop.permute.xlu0 %1028
    %v1030 = vrot.slane %v1029, 6
    %v1031 = vsel %vm579, %v1030, %v1029
    %v1033 = vadd.f32 %v963, %v1031
    %s1034 = sld [smem:[#allocation7 + $0x5c]]
    %v1035 = vstv %s1034
    %v1036 = vmul.f32 %v1035, %v883
    %1038 = vrot.lane.b32.xlu0 %v1036, 32
    %v1039 = vpop.permute.xlu0 %1038
    %v1040 = vrot.slane %v1039, 6
    %v1041 = vsel %vm579, %v1040, %v1039
    %v1043 = vadd.f32 %v973, %v1041
    %s1044 = sld [smem:[#allocation7 + $0x5d]]
    %v1045 = vstv %s1044
    %v1046 = vmul.f32 %v1045, %v883
    %1048 = vrot.lane.b32.xlu0 %v1046, 32
    %v1049 = vpop.permute.xlu0 %1048
    %v1050 = vrot.slane %v1049, 6
    %v1051 = vsel %vm579, %v1050, %v1049
    %v1053 = vadd.f32 %v983, %v1051
    %s1054 = sld [smem:[#allocation7 + $0x5e]]
    %v1055 = vstv %s1054
    %v1056 = vmul.f32 %v1055, %v883
    %1058 = vrot.lane.b32.xlu0 %v1056, 32
    %v1059 = vpop.permute.xlu0 %1058
    %v1060 = vrot.slane %v1059, 6
    %v1061 = vsel %vm579, %v1060, %v1059
    %v1063 = vadd.f32 %v993, %v1061
    %s1064 = sld [smem:[#allocation7 + $0x5f]]
    %v1065 = vstv %s1064
    %v1066 = vmul.f32 %v1065, %v883
    %1068 = vrot.lane.b32.xlu0 %v1066, 32
    %v1069 = vpop.permute.xlu0 %1068
    %v1070 = vrot.slane %v1069, 6
    %v1071 = vsel %vm579, %v1070, %v1069
    %v1073 = vadd.f32 %v1003, %v1071
    %s1074 = sld [smem:[#allocation7 + $0x60]]
    %v1075 = vstv %s1074
    %v1076 = vmul.f32 %v1075, %v883
    %1078 = vrot.lane.b32.xlu0 %v1076, 32
    %v1079 = vpop.permute.xlu0 %1078
    %v1080 = vrot.slane %v1079, 6
    %v1081 = vsel %vm579, %v1080, %v1079
    %v1083 = vadd.f32 %v1013, %v1081
    %s1084 = sld [smem:[#allocation7 + $0x61]]
    %v1085 = vstv %s1084
    %v1086 = vmul.f32 %v1085, %v883
    %1088 = vrot.lane.b32.xlu0 %v1086, 32
    %v1089 = vpop.permute.xlu0 %1088
    %v1090 = vrot.slane %v1089, 6
    %v1091 = vsel %vm579, %v1090, %v1089
    %v1093 = vadd.f32 %v1023, %v1091
    %1095 = vst [vmem:[#allocation1] ss:$4 sm:$0xff] %v1033
    %v1096 = vld.sshfl [vmem:[#allocation1] sm:$0xff pattern:$0x73625140]
    %v1097 = vld.sshfl [vmem:[#allocation1 + $0x8] sm:$0xff pattern:$0x73625140]
    %v1098 = vld.sshfl [vmem:[#allocation1 + $0x10] sm:$0xff pattern:$0x73625140]
    %1099 = vrot.lane.b32.xlu0 %v1096, 48
    %v1100 = vpop.permute.xlu0 %1099
    %1101 = vrot.lane.b32.xlu0 %v1097, 48
    %v1102 = vpop.permute.xlu0 %1101
    %1103 = vrot.lane.b32.xlu0 %v1098, 48
    %v1104 = vpop.permute.xlu0 %1103
    %v1105 = vsel %vm508, %v1100, %v1102
    %v1106 = vsel %vm508, %v1102, %v1104
    %1109 = vrot.lane.b32.xlu0 %v1105, 3
    %v1110 = vpop.permute.xlu0 %1109
    %1111 = vrot.lane.b32.xlu0 %v1106, 3
    %v1112 = vpop.permute.xlu0 %1111
    %vm1113 = vcmp.lt.s32.totalorder %v182, 3
    %v1114 = vsel %vm1113, %v1110, %v1112
    %v1115 = vsel %vm1113, %v1112, %v1110
    %v1116 = vadd.s32 %v184, 4294967293
    %v1117 = vadd.s32 %v185, 4294967293
    %vm1118 = vcmp.ge.s32.totalorder %v1116, 0
    %vm1119 = vcmp.ge.s32.totalorder %v1117, 0
    %vm1120 = vcmp.lt.s32.totalorder %v1116, 16
    %vm1121 = vcmp.lt.s32.totalorder %v1117, 16
    %vm1122 = vmand %vm1118, %vm1120
    %vm1123 = vmand %vm1119, %vm1121
    %v1124 = vsel %vm1122, %v1115, 0.0
    %v1125 = vsel %vm1123, %v1114, 0.0
    %v1128 = vrot.slane %v1125, 6
    %v1129 = vsel %vm146, %v1124, %v1128
    %1130 = vrot.lane.b32.xlu0 %v1129, 80
    %v1131 = vpop.permute.xlu0 %1130
    %v1132 = vrot.slane %v1131, 6
    %v1133 = vsel %vm365, %v1132, %v1131
    %v1135 = vadd.f32 %v1063, %v1133
    %1137 = vst [vmem:[#allocation1] ss:$4 sm:$0xff] %v1043
    %v1138 = vld.sshfl [vmem:[#allocation1] sm:$0xff pattern:$0x73625140]
    %v1139 = vld.sshfl [vmem:[#allocation1 + $0x8] sm:$0xff pattern:$0x73625140]
    %v1140 = vld.sshfl [vmem:[#allocation1 + $0x10] sm:$0xff pattern:$0x73625140]
    %1141 = vrot.lane.b32.xlu0 %v1138, 48
    %v1142 = vpop.permute.xlu0 %1141
    %1143 = vrot.lane.b32.xlu0 %v1139, 48
    %v1144 = vpop.permute.xlu0 %1143
    %1145 = vrot.lane.b32.xlu0 %v1140, 48
    %v1146 = vpop.permute.xlu0 %1145
    %v1147 = vsel %vm508, %v1142, %v1144
    %v1148 = vsel %vm508, %v1144, %v1146
    %1151 = vrot.lane.b32.xlu0 %v1147, 2
    %v1152 = vpop.permute.xlu0 %1151
    %1153 = vrot.lane.b32.xlu0 %v1148, 2
    %v1154 = vpop.permute.xlu0 %1153
    %vm1155 = vcmp.lt.s32.totalorder %v182, 2
    %v1156 = vsel %vm1155, %v1152, %v1154
    %v1157 = vsel %vm1155, %v1154, %v1152
    %v1158 = vadd.s32 %v184, 4294967294
    %v1159 = vadd.s32 %v185, 4294967294
    %vm1160 = vcmp.ge.s32.totalorder %v1158, 0
    %vm1161 = vcmp.ge.s32.totalorder %v1159, 0
    %vm1162 = vcmp.lt.s32.totalorder %v1158, 16
    %vm1163 = vcmp.lt.s32.totalorder %v1159, 16
    %vm1164 = vmand %vm1160, %vm1162
    %vm1165 = vmand %vm1161, %vm1163
    %v1166 = vsel %vm1164, %v1157, 0.0
    %v1167 = vsel %vm1165, %v1156, 0.0
    %v1170 = vrot.slane %v1167, 6
    %v1171 = vsel %vm146, %v1166, %v1170
    %1172 = vrot.lane.b32.xlu0 %v1171, 80
    %v1173 = vpop.permute.xlu0 %1172
    %v1174 = vrot.slane %v1173, 6
    %v1175 = vsel %vm365, %v1174, %v1173
    %v1177 = vadd.f32 %v1135, %v1175
    %1179 = vst [vmem:[#allocation1] ss:$4 sm:$0xff] %v1053
    %v1180 = vld.sshfl [vmem:[#allocation1] sm:$0xff pattern:$0x73625140]
    %v1181 = vld.sshfl [vmem:[#allocation1 + $0x8] sm:$0xff pattern:$0x73625140]
    %v1182 = vld.sshfl [vmem:[#allocation1 + $0x10] sm:$0xff pattern:$0x73625140]
    %1183 = vrot.lane.b32.xlu0 %v1180, 48
    %v1184 = vpop.permute.xlu0 %1183
    %1185 = vrot.lane.b32.xlu0 %v1181, 48
    %v1186 = vpop.permute.xlu0 %1185
    %1187 = vrot.lane.b32.xlu0 %v1182, 48
    %v1188 = vpop.permute.xlu0 %1187
    %v1189 = vsel %vm508, %v1184, %v1186
    %v1190 = vsel %vm508, %v1186, %v1188
    %1193 = vrot.lane.b32.xlu0 %v1189, 1
    %v1194 = vpop.permute.xlu0 %1193
    %1195 = vrot.lane.b32.xlu0 %v1190, 1
    %v1196 = vpop.permute.xlu0 %1195
    %vm1197 = vcmp.lt.s32.totalorder %v182, 1
    %v1198 = vsel %vm1197, %v1194, %v1196
    %v1199 = vsel %vm1197, %v1196, %v1194
    %v1200 = vadd.s32 %v184, 4294967295
    %v1201 = vadd.s32 %v185, 4294967295
    %vm1202 = vcmp.ge.s32.totalorder %v1200, 0
    %vm1203 = vcmp.ge.s32.totalorder %v1201, 0
    %vm1204 = vcmp.lt.s32.totalorder %v1200, 16
    %vm1205 = vcmp.lt.s32.totalorder %v1201, 16
    %vm1206 = vmand %vm1202, %vm1204
    %vm1207 = vmand %vm1203, %vm1205
    %v1208 = vsel %vm1206, %v1199, 0.0
    %v1209 = vsel %vm1207, %v1198, 0.0
    %v1212 = vrot.slane %v1209, 6
    %v1213 = vsel %vm146, %v1208, %v1212
    %1214 = vrot.lane.b32.xlu0 %v1213, 80
    %v1215 = vpop.permute.xlu0 %1214
    %v1216 = vrot.slane %v1215, 6
    %v1217 = vsel %vm365, %v1216, %v1215
    %v1219 = vadd.f32 %v1177, %v1217
    %1221 = vst [vmem:[#allocation1] ss:$4 sm:$0xff] %v1073
    %v1222 = vld.sshfl [vmem:[#allocation1] sm:$0xff pattern:$0x73625140]
    %v1223 = vld.sshfl [vmem:[#allocation1 + $0x8] sm:$0xff pattern:$0x73625140]
    %v1224 = vld.sshfl [vmem:[#allocation1 + $0x10] sm:$0xff pattern:$0x73625140]
    %1225 = vrot.lane.b32.xlu0 %v1222, 48
    %v1226 = vpop.permute.xlu0 %1225
    %1227 = vrot.lane.b32.xlu0 %v1223, 48
    %v1228 = vpop.permute.xlu0 %1227
    %1229 = vrot.lane.b32.xlu0 %v1224, 48
    %v1230 = vpop.permute.xlu0 %1229
    %v1231 = vsel %vm508, %v1226, %v1228
    %v1232 = vsel %vm508, %v1228, %v1230
    %1235 = vrot.lane.b32.xlu0 %v1231, 127
    %v1236 = vpop.permute.xlu0 %1235
    %1237 = vrot.lane.b32.xlu0 %v1232, 127
    %v1238 = vpop.permute.xlu0 %1237
    %vm1239 = vcmp.lt.s32.totalorder %v182, 127
    %v1240 = vsel %vm1239, %v1236, %v1238
    %v1241 = vsel %vm1239, %v1238, %v1236
    %v1242 = vadd.s32 %v184, 1
    %v1243 = vadd.s32 %v185, 1
    %vm1244 = vcmp.ge.s32.totalorder %v1242, 0
    %vm1245 = vcmp.ge.s32.totalorder %v1243, 0
    %vm1246 = vcmp.lt.s32.totalorder %v1242, 16
    %vm1247 = vcmp.lt.s32.totalorder %v1243, 16
    %vm1248 = vmand %vm1244, %vm1246
    %vm1249 = vmand %vm1245, %vm1247
    %v1250 = vsel %vm1248, %v1240, 0.0
    %v1251 = vsel %vm1249, %v1241, 0.0
    %v1254 = vrot.slane %v1251, 6
    %v1255 = vsel %vm146, %v1250, %v1254
    %1256 = vrot.lane.b32.xlu0 %v1255, 80
    %v1257 = vpop.permute.xlu0 %1256
    %v1258 = vrot.slane %v1257, 6
    %v1259 = vsel %vm365, %v1258, %v1257
    %v1261 = vadd.f32 %v1219, %v1259
    %1263 = vst [vmem:[#allocation1] ss:$4 sm:$0xff] %v1083
    %v1264 = vld.sshfl [vmem:[#allocation1] sm:$0xff pattern:$0x73625140]
    %v1265 = vld.sshfl [vmem:[#allocation1 + $0x8] sm:$0xff pattern:$0x73625140]
    %v1266 = vld.sshfl [vmem:[#allocation1 + $0x10] sm:$0xff pattern:$0x73625140]
    %1267 = vrot.lane.b32.xlu0 %v1264, 48
    %v1268 = vpop.permute.xlu0 %1267
    %1269 = vrot.lane.b32.xlu0 %v1265, 48
    %v1270 = vpop.permute.xlu0 %1269
    %1271 = vrot.lane.b32.xlu0 %v1266, 48
    %v1272 = vpop.permute.xlu0 %1271
    %v1273 = vsel %vm508, %v1268, %v1270
    %v1274 = vsel %vm508, %v1270, %v1272
    %1277 = vrot.lane.b32.xlu0 %v1273, 126
    %v1278 = vpop.permute.xlu0 %1277
    %1279 = vrot.lane.b32.xlu0 %v1274, 126
    %v1280 = vpop.permute.xlu0 %1279
    %vm1281 = vcmp.lt.s32.totalorder %v182, 126
    %v1282 = vsel %vm1281, %v1278, %v1280
    %v1283 = vsel %vm1281, %v1280, %v1278
    %v1284 = vadd.s32 %v184, 2
    %v1285 = vadd.s32 %v185, 2
    %vm1286 = vcmp.ge.s32.totalorder %v1284, 0
    %vm1287 = vcmp.ge.s32.totalorder %v1285, 0
    %vm1288 = vcmp.lt.s32.totalorder %v1284, 16
    %vm1289 = vcmp.lt.s32.totalorder %v1285, 16
    %vm1290 = vmand %vm1286, %vm1288
    %vm1291 = vmand %vm1287, %vm1289
    %v1292 = vsel %vm1290, %v1282, 0.0
    %v1293 = vsel %vm1291, %v1283, 0.0
    %v1296 = vrot.slane %v1293, 6
    %v1297 = vsel %vm146, %v1292, %v1296
    %1298 = vrot.lane.b32.xlu0 %v1297, 80
    %v1299 = vpop.permute.xlu0 %1298
    %v1300 = vrot.slane %v1299, 6
    %v1301 = vsel %vm365, %v1300, %v1299
    %v1303 = vadd.f32 %v1261, %v1301
    %1305 = vst [vmem:[#allocation1] ss:$4 sm:$0xff] %v1093
    %v1306 = vld.sshfl [vmem:[#allocation1] sm:$0xff pattern:$0x73625140]
    %v1307 = vld.sshfl [vmem:[#allocation1 + $0x8] sm:$0xff pattern:$0x73625140]
    %v1308 = vld.sshfl [vmem:[#allocation1 + $0x10] sm:$0xff pattern:$0x73625140]
    %1309 = vrot.lane.b32.xlu0 %v1306, 48
    %v1310 = vpop.permute.xlu0 %1309
    %1311 = vrot.lane.b32.xlu0 %v1307, 48
    %v1312 = vpop.permute.xlu0 %1311
    %1313 = vrot.lane.b32.xlu0 %v1308, 48
    %v1314 = vpop.permute.xlu0 %1313
    %v1315 = vsel %vm508, %v1310, %v1312
    %v1316 = vsel %vm508, %v1312, %v1314
    %1319 = vrot.lane.b32.xlu0 %v1315, 125
    %v1320 = vpop.permute.xlu0 %1319
    %1321 = vrot.lane.b32.xlu0 %v1316, 125
    %v1322 = vpop.permute.xlu0 %1321
    %vm1323 = vcmp.lt.s32.totalorder %v182, 125
    %v1324 = vsel %vm1323, %v1320, %v1322
    %v1325 = vsel %vm1323, %v1322, %v1320
    %v1326 = vadd.s32 %v184, 3
    %v1327 = vadd.s32 %v185, 3
    %vm1328 = vcmp.ge.s32.totalorder %v1326, 0
    %vm1329 = vcmp.ge.s32.totalorder %v1327, 0
    %vm1330 = vcmp.lt.s32.totalorder %v1326, 16
    %vm1331 = vcmp.lt.s32.totalorder %v1327, 16
    %vm1332 = vmand %vm1328, %vm1330
    %vm1333 = vmand %vm1329, %vm1331
    %v1334 = vsel %vm1332, %v1324, 0.0
    %v1335 = vsel %vm1333, %v1325, 0.0
    %v1338 = vrot.slane %v1335, 6
    %v1339 = vsel %vm146, %v1334, %v1338
    %1340 = vrot.lane.b32.xlu0 %v1339, 80
    %v1341 = vpop.permute.xlu0 %1340
    %v1342 = vrot.slane %v1341, 6
    %v1343 = vsel %vm365, %v1342, %v1341
    %v1345 = vadd.f32 %v1303, %v1343
    %v1346 = vxor.u32 %v1345, 2147483648
    %v1347 = vmul.f32 %v1346, 1.442695
    %v1348 = vpow.pop %v1347
    %v1349 = vadd.f32 %v1348, 1.0
    %v1350 = vrcp.pop %v1349
    %v1351 = vmul.f32 %v1349, %v1350
    %v1352 = vsub.f32 1.0, %v1351
    %v1353 = vmul.f32 %v1350, %v1352
    %v1354 = vadd.f32 %v1350, %v1353
    %vm1355 = vweird.f32 %v1349
    %vm1356 = vweird.f32 %v1350
    %vm1357 = vmor %vm1355, %vm1356
    %v1358 = vsel %vm1357, %v1350, %v1354
    %v1359 = vand.u32 2147483647, %v1349
    %vm1360 = vcmp.eq.f32.partialorder %v1359, 8.507059e+37
    %v1361 = vand.u32 %v1349, 2147483648
    %v1362 = vor.u32 1.1754944e-38, %v1361
    %v1363 = vsel %vm1360, %v1362, %v1358
    %v1364 = vmul.f32 1.0, %v1363
    %1366 = vrot.lane.b32.xlu0 %v1364, 48
    %v1367 = vpop.permute.xlu0 %1366
    %v1368 = vrot.slane %v1367, 2
    %v1369 = vsel %vm508, %v1367, %v1368
    %1371 = vst [vmem:[#allocation8] sm:$0xf] %v1369
    // Predicated region
    $region18: #{tpu_custom_call.1} parent=1 // pred_check
      _
    $region19: #{tpu_custom_call.1} parent=1 // pred_check_branch
      %1373 = sbr.rel (0) target = $region21
    $region20: #{tpu_custom_call.1} parent=1 // pred_region
      %1375 = vsyncadd [#allocation5], 0
      %s1377 = sshll.u32 [#allocation8], 4
      %s1378 = int_to_ptr.vmem [resolvable:$true] %s1377
      %s1379 = sshll.u32 %s2, 4
      %s1380 = int_to_ptr.hbm [resolvable:$true] %s1379
      %1382 = dma.vmem_to_hbm [thread:$0]  %s1378, 64, %s1380, [#allocation5]
    $region21: #{tpu_custom_call.1} parent=1 // pred_fallthru
      _
    // Predicated region
    $region22: #{tpu_custom_call.1} parent=1 // pred_check
      _
    $region23: #{tpu_custom_call.1} parent=1 // pred_check_branch
      %1384 = sbr.rel (0) target = $region25
    $region24: #{tpu_custom_call.1} parent=1 // pred_region
      %1386 = dma.done [#allocation5], 64
    $region25: #{tpu_custom_call.1} parent=1 // pred_fallthru
      _
    %1387 = vsyncpa [#allocation4], 1
    %1388 = vsyncpa [#allocation5], 1
    %1389 = vsyncpa [#allocation6], 1

</llo_original>
